<compile_context>
chip_gen: v7x
topology: tpu7x:2x2x1
jax: 0.10.0
libtpu: 0.0.40
codegen_flags: <defaults>
</compile_context>

<pallas_src>
import jax
import jax.numpy as jnp
import numpy as np
from jax.experimental import pallas as pl
from jax.experimental.pallas import tpu as pltpu

INPUT_DIM = 20
HIDDEN_DIM = 100
OUTPUT_DIM = 20
NUM_HIDDEN_LAYERS = 10  # as in the PyTorch module default

IN_PAD = 32    # input features padded 20 -> 32 (contiguous DMA rows)
H_PAD = 128    # hidden dim padded to one full lane width
OUT_PAD = 128  # output dim padded for lane-dense stores
TILE_B = 512   # batch tile (amortizes per-step overhead / MXU weight pushes)


# ------------------------------- kernel -------------------------------------

def make_kernel(mxu_dtype, act_dtype, approx_sigmoid):
    def sigmoid(v):
        # exp goes to the EUP; reciprocal (approx) also rides the EUP slot.
        return pl.reciprocal(1.0 + jnp.exp(-v), approx=approx_sigmoid)

    def kernel(x_ref, w_in_ref, b_in_ref, w_hid_ref, b_hid_ref,
               w_out_ref, b_out_ref, o_ref):
        # Layer 0: Linear(INPUT, HIDDEN) + Sigmoid (bias/sigmoid in f32).
        h = jnp.dot(x_ref[...].astype(mxu_dtype), w_in_ref[...],
                    preferred_element_type=jnp.float32)
        h = sigmoid(h + b_in_ref[...]).astype(act_dtype)

        # 9 x [Linear(HIDDEN, HIDDEN) + ReLU], statically unrolled; weights
        # stay resident in VMEM so layer i's bias/ReLU (VPU) overlaps layer
        # i+1's MXU pushes. MXU always accumulates in f32; the bias-add/ReLU
        # run in act_dtype (f32 everywhere-safe, bf16 fast path on v6e/v7x).
        for i in range(NUM_HIDDEN_LAYERS - 1):
            z = jnp.dot(h.astype(mxu_dtype), w_hid_ref[i],
                        preferred_element_type=jnp.float32)
            b = b_hid_ref[i].astype(act_dtype)
            h = jnp.maximum(z.astype(act_dtype) + b, 0.0).astype(act_dtype)

        # Output layer: Linear(HIDDEN, OUTPUT) + Sigmoid (lane-dense store).
        y = jnp.dot(h.astype(mxu_dtype), w_out_ref[...],
                    preferred_element_type=jnp.float32)
        o_ref[...] = sigmoid(y + b_out_ref[...])

    return kernel


# ------------------------------- wrapper -------------------------------------

def deep_binary_net(x, padded_params, *, tile_b=TILE_B,
                    act_dtype=jnp.float32, approx_sigmoid=False):
    """x: (B, INPUT_DIM) f32. padded_params from pad_params().

    Returns (B, OUTPUT_DIM) f32. MXU dtype is taken from the padded weights
    (bf16 by default, cast once in pad_params).
    """
    w_in, b_in, w_hid, b_hid, w_out, b_out = padded_params
    mxu_dtype = w_in.dtype

    B, F = x.shape
    assert F == INPUT_DIM
    # Zero-pad the feature dim 20 -> 32 (zero weight rows cancel it exactly).
    x = jnp.pad(x, ((0, 0), (0, IN_PAD - INPUT_DIM)))

    # Batch tiling: a single right-sized tile (multiple of 8) for small
    # batches; otherwise TILE_B tiles rounded up to an EVEN tile count so the
    # "parallel" grid axis balances across v7x's two TensorCores.
    if B <= tile_b:
        tile_b = max(8, ((B + 7) // 8) * 8)
        n_tiles = 1
    else:
        n_tiles = pl.cdiv(B, tile_b)
        if n_tiles % 2:
            n_tiles += 1
    b_pad = n_tiles * tile_b
    if b_pad != B:
        x = jnp.pad(x, ((0, b_pad - B), (0, 0)))

    out_padded = pl.pallas_call(
        make_kernel(mxu_dtype, act_dtype, approx_sigmoid),
        out_shape=jax.ShapeDtypeStruct((b_pad, OUT_PAD), jnp.float32),
        grid=(n_tiles,),
        in_specs=[
            pl.BlockSpec((tile_b, IN_PAD), lambda i: (i, 0)),            # x tile
            pl.BlockSpec((IN_PAD, H_PAD), lambda i: (0, 0)),             # w_in (resident)
            pl.BlockSpec((1, H_PAD), lambda i: (0, 0)),                  # b_in
            pl.BlockSpec((NUM_HIDDEN_LAYERS - 1, H_PAD, H_PAD),
                         lambda i: (0, 0, 0)),                           # w_hid (resident)
            pl.BlockSpec((NUM_HIDDEN_LAYERS - 1, 1, H_PAD),
                         lambda i: (0, 0, 0)),                           # b_hid
            pl.BlockSpec((H_PAD, OUT_PAD), lambda i: (0, 0)),            # w_out (resident)
            pl.BlockSpec((1, OUT_PAD), lambda i: (0, 0)),                # b_out
        ],
        out_specs=pl.BlockSpec((tile_b, OUT_PAD), lambda i: (i, 0)),
        compiler_params=pltpu.CompilerParams(
            dimension_semantics=("parallel",)),  # megacore sharding on v7x
    )(x, w_in, b_in, w_hid, b_hid, w_out, b_out)

    return out_padded[:B, :OUTPUT_DIM]


# ----------------------------- parameters -----------------------------------

def xavier_uniform(key, fan_in, fan_out):
    a = np.sqrt(6.0 / (fan_in + fan_out))
    return jax.random.uniform(key, (fan_in, fan_out), jnp.float32, -a, a)


def init_params(key):
    """Unpadded, PyTorch-equivalent params (xavier_uniform weights, bias=0.5)."""
    keys = jax.random.split(key, NUM_HIDDEN_LAYERS + 1)
    w_in = xavier_uniform(keys[0], INPUT_DIM, HIDDEN_DIM)
    b_in = jnp.full((HIDDEN_DIM,), 0.5, jnp.float32)
    w_hid = jnp.stack([xavier_uniform(keys[i + 1], HIDDEN_DIM, HIDDEN_DIM)
                       for i in range(NUM_HIDDEN_LAYERS - 1)], axis=0)
    b_hid = jnp.full((NUM_HIDDEN_LAYERS - 1, HIDDEN_DIM), 0.5, jnp.float32)
    w_out = xavier_uniform(keys[NUM_HIDDEN_LAYERS], HIDDEN_DIM, OUTPUT_DIM)
    b_out = jnp.full((OUTPUT_DIM,), 0.5, jnp.float32)
    return (w_in, b_in, w_hid, b_hid, w_out, b_out)


def pad_params(params, mxu_dtype=jnp.bfloat16):
    """Zero-pad input (20->32), hidden (100->128) and output (20->128) dims,
    and cast the WEIGHTS once to the MXU dtype (biases stay f32).

    Zero rows/cols in the downstream weights kill any contribution from padded
    lanes (0.0 is exact in bf16 too), so real lanes stay bit-identical; padded
    output lanes come out as sigmoid(0)=0.5 and are sliced off in the wrapper.
    Padded bias lanes MUST remain exactly 0 for this argument to hold.
    """
    w_in, b_in, w_hid, b_hid, w_out, b_out = params
    w_in_p = (jnp.zeros((IN_PAD, H_PAD), jnp.float32)
              .at[:INPUT_DIM, :HIDDEN_DIM].set(w_in).astype(mxu_dtype))
    b_in_p = jnp.zeros((1, H_PAD), jnp.float32).at[0, :HIDDEN_DIM].set(b_in)
    w_hid_p = (jnp.zeros((NUM_HIDDEN_LAYERS - 1, H_PAD, H_PAD), jnp.float32)
               .at[:, :HIDDEN_DIM, :HIDDEN_DIM].set(w_hid).astype(mxu_dtype))
    b_hid_p = (jnp.zeros((NUM_HIDDEN_LAYERS - 1, 1, H_PAD), jnp.float32)
               .at[:, 0, :HIDDEN_DIM].set(b_hid))
    w_out_p = (jnp.zeros((H_PAD, OUT_PAD), jnp.float32)
               .at[:HIDDEN_DIM, :OUTPUT_DIM].set(w_out).astype(mxu_dtype))
    b_out_p = jnp.zeros((1, OUT_PAD), jnp.float32).at[0, :OUTPUT_DIM].set(b_out)
    return (w_in_p, b_in_p, w_hid_p, b_hid_p, w_out_p, b_out_p)


def reference_forward(x, params):
    w_in, b_in, w_hid, b_hid, w_out, b_out = params
    h = jax.nn.sigmoid(x @ w_in + b_in)
    for i in range(NUM_HIDDEN_LAYERS - 1):
        h = jax.nn.relu(h @ w_hid[i] + b_hid[i])
    return jax.nn.sigmoid(h @ w_out + b_out)


# ------------------------------- test ----------------------------------------

if __name__ == "__main__":
    key = jax.random.PRNGKey(0)
    k_x, k_p = jax.random.split(key)
    params = init_params(k_p)
    padded_f32 = pad_params(params, mxu_dtype=jnp.float32)   # exact path
    padded_bf16 = pad_params(params)                          # default fast path

    # Small correctness shape (single right-sized tile), exact f32 path.
    x_small = jax.random.normal(k_x, (8, INPUT_DIM), jnp.float32)
    out_small = jax.block_until_ready(deep_binary_net(x_small, padded_f32))
    ref_small = reference_forward(x_small, params)
    np.testing.assert_allclose(np.asarray(out_small), np.asarray(ref_small),
                               rtol=1e-5, atol=1e-5)

    # Multi-tile grid (tile_b=128 -> 3 tiles bumped to 4 for even megacore
    # split, ragged batch) — exercises the batch pipeline + resident weights,
    # exact f32 path.
    x_big = jax.random.normal(k_x, (300, INPUT_DIM), jnp.float32)
    out_big = jax.block_until_ready(
        deep_binary_net(x_big, padded_f32, tile_b=128))
    ref_big = reference_forward(x_big, params)
    np.testing.assert_allclose(np.asarray(out_big), np.asarray(ref_big),
                               rtol=1e-5, atol=1e-5)

    # Default fast path (all generations): bf16 MXU operands (f32 accumulate),
    # f32 bias/activation math — loose tolerance (bf16 weights change numerics).
    out_bf16 = jax.block_until_ready(deep_binary_net(x_big, padded_bf16))
    np.testing.assert_allclose(np.asarray(out_bf16), np.asarray(ref_big),
                               rtol=0, atol=0.1)

    # v6e/v7x extra-fast path: bf16 activations + approx reciprocal sigmoid.
    out_fast = jax.block_until_ready(
        deep_binary_net(x_big, padded_bf16, act_dtype=jnp.bfloat16,
                        approx_sigmoid=True))
    np.testing.assert_allclose(np.asarray(out_fast), np.asarray(ref_big),
                               rtol=0, atol=0.1)

    print("KERNEL_OK")
</pallas_src>

<mosaic_0001>
module attributes {stable_mosaic.version = 11 : i64} {
  func.func @kernel(%arg0: i32, %arg1: memref<8x32xf32, #tpu.memory_space<vmem>>, %arg2: memref<32x128xf32, #tpu.memory_space<vmem>>, %arg3: memref<1x128xf32, #tpu.memory_space<vmem>>, %arg4: memref<9x128x128xf32, #tpu.memory_space<vmem>>, %arg5: memref<9x1x128xf32, #tpu.memory_space<vmem>>, %arg6: memref<128x128xf32, #tpu.memory_space<vmem>>, %arg7: memref<1x128xf32, #tpu.memory_space<vmem>>, %arg8: memref<8x128xf32, #tpu.memory_space<vmem>>) attributes {dimension_semantics = [#tpu.dimension_semantics<parallel>], iteration_bounds = array<i64: 1>, scalar_prefetch = 0 : i64, scratch_operands = 0 : i64, tpu.core_type = #tpu.core_type<tc>, window_params = [{transform_indices = @transform_0, window_bounds = array<i64: 8, 32>}, {pipeline_mode = #tpu.pipeline_mode<synchronous>, transform_indices = @transform_1, window_bounds = array<i64: 32, 128>}, {pipeline_mode = #tpu.pipeline_mode<synchronous>, transform_indices = @transform_2, window_bounds = array<i64: 1, 128>}, {pipeline_mode = #tpu.pipeline_mode<synchronous>, transform_indices = @transform_3, window_bounds = array<i64: 9, 128, 128>}, {pipeline_mode = #tpu.pipeline_mode<synchronous>, transform_indices = @transform_4, window_bounds = array<i64: 9, 1, 128>}, {pipeline_mode = #tpu.pipeline_mode<synchronous>, transform_indices = @transform_5, window_bounds = array<i64: 128, 128>}, {pipeline_mode = #tpu.pipeline_mode<synchronous>, transform_indices = @transform_6, window_bounds = array<i64: 1, 128>}, {transform_indices = @transform_7, window_bounds = array<i64: 8, 128>}]} {
    %c0 = arith.constant 0 : index
    %c0_0 = arith.constant 0 : index
    %0 = vector.load %arg1[%c0, %c0_0] : memref<8x32xf32, #tpu.memory_space<vmem>>, vector<8x32xf32>
    %c0_1 = arith.constant 0 : index
    %c0_2 = arith.constant 0 : index
    %1 = vector.load %arg2[%c0_1, %c0_2] : memref<32x128xf32, #tpu.memory_space<vmem>>, vector<32x128xf32>
    %cst = arith.constant dense<0.000000e+00> : vector<8x128xf32>
    %2 = tpu.matmul %0, %1, %cst {dimension_numbers = #tpu.dot_dimension_numbers<[1], [0], [0], [1], [0, 0, 1, 1], [], []>} : vector<8x32xf32>, vector<32x128xf32>, vector<8x128xf32> -> vector<8x128xf32>
    %c0_3 = arith.constant 0 : index
    %c0_4 = arith.constant 0 : index
    %3 = vector.load %arg3[%c0_3, %c0_4] : memref<1x128xf32, #tpu.memory_space<vmem>>, vector<1x128xf32>
    %4 = vector.broadcast %3 : vector<1x128xf32> to vector<8x128xf32>
    %5 = arith.addf %2, %4 : vector<8x128xf32>
    %cst_5 = arith.constant 0.000000e+00 : f32
    %6 = vector.broadcast %cst_5 : f32 to vector<8x128xf32>
    %7 = arith.subf %6, %5 : vector<8x128xf32>
    %8 = math.exp %7 : vector<8x128xf32>
    %cst_6 = arith.constant 1.000000e+00 : f32
    %9 = vector.broadcast %cst_6 : f32 to vector<8x128xf32>
    %10 = arith.addf %9, %8 : vector<8x128xf32>
    %11 = tpu.reciprocal %10 : vector<8x128xf32> -> vector<8x128xf32>
    %c0_7 = arith.constant 0 : index
    %c0_8 = arith.constant 0 : index
    %c0_9 = arith.constant 0 : index
    %12 = vector.load %arg4[%c0_7, %c0_8, %c0_9] : memref<9x128x128xf32, #tpu.memory_space<vmem>>, vector<1x128x128xf32>
    %13 = vector.shape_cast %12 : vector<1x128x128xf32> to vector<128x128xf32>
    %cst_10 = arith.constant dense<0.000000e+00> : vector<8x128xf32>
    %14 = tpu.matmul %11, %13, %cst_10 {dimension_numbers = #tpu.dot_dimension_numbers<[1], [0], [0], [1], [0, 0, 1, 1], [], []>} : vector<8x128xf32>, vector<128x128xf32>, vector<8x128xf32> -> vector<8x128xf32>
    %c0_11 = arith.constant 0 : index
    %c0_12 = arith.constant 0 : index
    %c0_13 = arith.constant 0 : index
    %15 = vector.load %arg5[%c0_11, %c0_12, %c0_13] : memref<9x1x128xf32, #tpu.memory_space<vmem>>, vector<1x1x128xf32>
    %16 = vector.shape_cast %15 : vector<1x1x128xf32> to vector<1x128xf32>
    %17 = vector.broadcast %16 : vector<1x128xf32> to vector<8x128xf32>
    %18 = arith.addf %14, %17 : vector<8x128xf32>
    %cst_14 = arith.constant 0.000000e+00 : f32
    %19 = vector.broadcast %cst_14 : f32 to vector<8x128xf32>
    %20 = arith.maximumf %18, %19 : vector<8x128xf32>
    %c1 = arith.constant 1 : index
    %c0_15 = arith.constant 0 : index
    %c0_16 = arith.constant 0 : index
    %21 = vector.load %arg4[%c1, %c0_15, %c0_16] : memref<9x128x128xf32, #tpu.memory_space<vmem>>, vector<1x128x128xf32>
    %22 = vector.shape_cast %21 : vector<1x128x128xf32> to vector<128x128xf32>
    %cst_17 = arith.constant dense<0.000000e+00> : vector<8x128xf32>
    %23 = tpu.matmul %20, %22, %cst_17 {dimension_numbers = #tpu.dot_dimension_numbers<[1], [0], [0], [1], [0, 0, 1, 1], [], []>} : vector<8x128xf32>, vector<128x128xf32>, vector<8x128xf32> -> vector<8x128xf32>
    %c1_18 = arith.constant 1 : index
    %c0_19 = arith.constant 0 : index
    %c0_20 = arith.constant 0 : index
    %24 = vector.load %arg5[%c1_18, %c0_19, %c0_20] : memref<9x1x128xf32, #tpu.memory_space<vmem>>, vector<1x1x128xf32>
    %25 = vector.shape_cast %24 : vector<1x1x128xf32> to vector<1x128xf32>
    %26 = vector.broadcast %25 : vector<1x128xf32> to vector<8x128xf32>
    %27 = arith.addf %23, %26 : vector<8x128xf32>
    %cst_21 = arith.constant 0.000000e+00 : f32
    %28 = vector.broadcast %cst_21 : f32 to vector<8x128xf32>
    %29 = arith.maximumf %27, %28 : vector<8x128xf32>
    %c2 = arith.constant 2 : index
    %c0_22 = arith.constant 0 : index
    %c0_23 = arith.constant 0 : index
    %30 = vector.load %arg4[%c2, %c0_22, %c0_23] : memref<9x128x128xf32, #tpu.memory_space<vmem>>, vector<1x128x128xf32>
    %31 = vector.shape_cast %30 : vector<1x128x128xf32> to vector<128x128xf32>
    %cst_24 = arith.constant dense<0.000000e+00> : vector<8x128xf32>
    %32 = tpu.matmul %29, %31, %cst_24 {dimension_numbers = #tpu.dot_dimension_numbers<[1], [0], [0], [1], [0, 0, 1, 1], [], []>} : vector<8x128xf32>, vector<128x128xf32>, vector<8x128xf32> -> vector<8x128xf32>
    %c2_25 = arith.constant 2 : index
    %c0_26 = arith.constant 0 : index
    %c0_27 = arith.constant 0 : index
    %33 = vector.load %arg5[%c2_25, %c0_26, %c0_27] : memref<9x1x128xf32, #tpu.memory_space<vmem>>, vector<1x1x128xf32>
    %34 = vector.shape_cast %33 : vector<1x1x128xf32> to vector<1x128xf32>
    %35 = vector.broadcast %34 : vector<1x128xf32> to vector<8x128xf32>
    %36 = arith.addf %32, %35 : vector<8x128xf32>
    %cst_28 = arith.constant 0.000000e+00 : f32
    %37 = vector.broadcast %cst_28 : f32 to vector<8x128xf32>
    %38 = arith.maximumf %36, %37 : vector<8x128xf32>
    %c3 = arith.constant 3 : index
    %c0_29 = arith.constant 0 : index
    %c0_30 = arith.constant 0 : index
    %39 = vector.load %arg4[%c3, %c0_29, %c0_30] : memref<9x128x128xf32, #tpu.memory_space<vmem>>, vector<1x128x128xf32>
    %40 = vector.shape_cast %39 : vector<1x128x128xf32> to vector<128x128xf32>
    %cst_31 = arith.constant dense<0.000000e+00> : vector<8x128xf32>
    %41 = tpu.matmul %38, %40, %cst_31 {dimension_numbers = #tpu.dot_dimension_numbers<[1], [0], [0], [1], [0, 0, 1, 1], [], []>} : vector<8x128xf32>, vector<128x128xf32>, vector<8x128xf32> -> vector<8x128xf32>
    %c3_32 = arith.constant 3 : index
    %c0_33 = arith.constant 0 : index
    %c0_34 = arith.constant 0 : index
    %42 = vector.load %arg5[%c3_32, %c0_33, %c0_34] : memref<9x1x128xf32, #tpu.memory_space<vmem>>, vector<1x1x128xf32>
    %43 = vector.shape_cast %42 : vector<1x1x128xf32> to vector<1x128xf32>
    %44 = vector.broadcast %43 : vector<1x128xf32> to vector<8x128xf32>
    %45 = arith.addf %41, %44 : vector<8x128xf32>
    %cst_35 = arith.constant 0.000000e+00 : f32
    %46 = vector.broadcast %cst_35 : f32 to vector<8x128xf32>
    %47 = arith.maximumf %45, %46 : vector<8x128xf32>
    %c4 = arith.constant 4 : index
    %c0_36 = arith.constant 0 : index
    %c0_37 = arith.constant 0 : index
    %48 = vector.load %arg4[%c4, %c0_36, %c0_37] : memref<9x128x128xf32, #tpu.memory_space<vmem>>, vector<1x128x128xf32>
    %49 = vector.shape_cast %48 : vector<1x128x128xf32> to vector<128x128xf32>
    %cst_38 = arith.constant dense<0.000000e+00> : vector<8x128xf32>
    %50 = tpu.matmul %47, %49, %cst_38 {dimension_numbers = #tpu.dot_dimension_numbers<[1], [0], [0], [1], [0, 0, 1, 1], [], []>} : vector<8x128xf32>, vector<128x128xf32>, vector<8x128xf32> -> vector<8x128xf32>
    %c4_39 = arith.constant 4 : index
    %c0_40 = arith.constant 0 : index
    %c0_41 = arith.constant 0 : index
    %51 = vector.load %arg5[%c4_39, %c0_40, %c0_41] : memref<9x1x128xf32, #tpu.memory_space<vmem>>, vector<1x1x128xf32>
    %52 = vector.shape_cast %51 : vector<1x1x128xf32> to vector<1x128xf32>
    %53 = vector.broadcast %52 : vector<1x128xf32> to vector<8x128xf32>
    %54 = arith.addf %50, %53 : vector<8x128xf32>
    %cst_42 = arith.constant 0.000000e+00 : f32
    %55 = vector.broadcast %cst_42 : f32 to vector<8x128xf32>
    %56 = arith.maximumf %54, %55 : vector<8x128xf32>
    %c5 = arith.constant 5 : index
    %c0_43 = arith.constant 0 : index
    %c0_44 = arith.constant 0 : index
    %57 = vector.load %arg4[%c5, %c0_43, %c0_44] : memref<9x128x128xf32, #tpu.memory_space<vmem>>, vector<1x128x128xf32>
    %58 = vector.shape_cast %57 : vector<1x128x128xf32> to vector<128x128xf32>
    %cst_45 = arith.constant dense<0.000000e+00> : vector<8x128xf32>
    %59 = tpu.matmul %56, %58, %cst_45 {dimension_numbers = #tpu.dot_dimension_numbers<[1], [0], [0], [1], [0, 0, 1, 1], [], []>} : vector<8x128xf32>, vector<128x128xf32>, vector<8x128xf32> -> vector<8x128xf32>
    %c5_46 = arith.constant 5 : index
    %c0_47 = arith.constant 0 : index
    %c0_48 = arith.constant 0 : index
    %60 = vector.load %arg5[%c5_46, %c0_47, %c0_48] : memref<9x1x128xf32, #tpu.memory_space<vmem>>, vector<1x1x128xf32>
    %61 = vector.shape_cast %60 : vector<1x1x128xf32> to vector<1x128xf32>
    %62 = vector.broadcast %61 : vector<1x128xf32> to vector<8x128xf32>
    %63 = arith.addf %59, %62 : vector<8x128xf32>
    %cst_49 = arith.constant 0.000000e+00 : f32
    %64 = vector.broadcast %cst_49 : f32 to vector<8x128xf32>
    %65 = arith.maximumf %63, %64 : vector<8x128xf32>
    %c6 = arith.constant 6 : index
    %c0_50 = arith.constant 0 : index
    %c0_51 = arith.constant 0 : index
    %66 = vector.load %arg4[%c6, %c0_50, %c0_51] : memref<9x128x128xf32, #tpu.memory_space<vmem>>, vector<1x128x128xf32>
    %67 = vector.shape_cast %66 : vector<1x128x128xf32> to vector<128x128xf32>
    %cst_52 = arith.constant dense<0.000000e+00> : vector<8x128xf32>
    %68 = tpu.matmul %65, %67, %cst_52 {dimension_numbers = #tpu.dot_dimension_numbers<[1], [0], [0], [1], [0, 0, 1, 1], [], []>} : vector<8x128xf32>, vector<128x128xf32>, vector<8x128xf32> -> vector<8x128xf32>
    %c6_53 = arith.constant 6 : index
    %c0_54 = arith.constant 0 : index
    %c0_55 = arith.constant 0 : index
    %69 = vector.load %arg5[%c6_53, %c0_54, %c0_55] : memref<9x1x128xf32, #tpu.memory_space<vmem>>, vector<1x1x128xf32>
    %70 = vector.shape_cast %69 : vector<1x1x128xf32> to vector<1x128xf32>
    %71 = vector.broadcast %70 : vector<1x128xf32> to vector<8x128xf32>
    %72 = arith.addf %68, %71 : vector<8x128xf32>
    %cst_56 = arith.constant 0.000000e+00 : f32
    %73 = vector.broadcast %cst_56 : f32 to vector<8x128xf32>
    %74 = arith.maximumf %72, %73 : vector<8x128xf32>
    %c7 = arith.constant 7 : index
    %c0_57 = arith.constant 0 : index
    %c0_58 = arith.constant 0 : index
    %75 = vector.load %arg4[%c7, %c0_57, %c0_58] : memref<9x128x128xf32, #tpu.memory_space<vmem>>, vector<1x128x128xf32>
    %76 = vector.shape_cast %75 : vector<1x128x128xf32> to vector<128x128xf32>
    %cst_59 = arith.constant dense<0.000000e+00> : vector<8x128xf32>
    %77 = tpu.matmul %74, %76, %cst_59 {dimension_numbers = #tpu.dot_dimension_numbers<[1], [0], [0], [1], [0, 0, 1, 1], [], []>} : vector<8x128xf32>, vector<128x128xf32>, vector<8x128xf32> -> vector<8x128xf32>
    %c7_60 = arith.constant 7 : index
    %c0_61 = arith.constant 0 : index
    %c0_62 = arith.constant 0 : index
    %78 = vector.load %arg5[%c7_60, %c0_61, %c0_62] : memref<9x1x128xf32, #tpu.memory_space<vmem>>, vector<1x1x128xf32>
    %79 = vector.shape_cast %78 : vector<1x1x128xf32> to vector<1x128xf32>
    %80 = vector.broadcast %79 : vector<1x128xf32> to vector<8x128xf32>
    %81 = arith.addf %77, %80 : vector<8x128xf32>
    %cst_63 = arith.constant 0.000000e+00 : f32
    %82 = vector.broadcast %cst_63 : f32 to vector<8x128xf32>
    %83 = arith.maximumf %81, %82 : vector<8x128xf32>
    %c8 = arith.constant 8 : index
    %c0_64 = arith.constant 0 : index
    %c0_65 = arith.constant 0 : index
    %84 = vector.load %arg4[%c8, %c0_64, %c0_65] : memref<9x128x128xf32, #tpu.memory_space<vmem>>, vector<1x128x128xf32>
    %85 = vector.shape_cast %84 : vector<1x128x128xf32> to vector<128x128xf32>
    %cst_66 = arith.constant dense<0.000000e+00> : vector<8x128xf32>
    %86 = tpu.matmul %83, %85, %cst_66 {dimension_numbers = #tpu.dot_dimension_numbers<[1], [0], [0], [1], [0, 0, 1, 1], [], []>} : vector<8x128xf32>, vector<128x128xf32>, vector<8x128xf32> -> vector<8x128xf32>
    %c8_67 = arith.constant 8 : index
    %c0_68 = arith.constant 0 : index
    %c0_69 = arith.constant 0 : index
    %87 = vector.load %arg5[%c8_67, %c0_68, %c0_69] : memref<9x1x128xf32, #tpu.memory_space<vmem>>, vector<1x1x128xf32>
    %88 = vector.shape_cast %87 : vector<1x1x128xf32> to vector<1x128xf32>
    %89 = vector.broadcast %88 : vector<1x128xf32> to vector<8x128xf32>
    %90 = arith.addf %86, %89 : vector<8x128xf32>
    %cst_70 = arith.constant 0.000000e+00 : f32
    %91 = vector.broadcast %cst_70 : f32 to vector<8x128xf32>
    %92 = arith.maximumf %90, %91 : vector<8x128xf32>
    %c0_71 = arith.constant 0 : index
    %c0_72 = arith.constant 0 : index
    %93 = vector.load %arg6[%c0_71, %c0_72] : memref<128x128xf32, #tpu.memory_space<vmem>>, vector<128x128xf32>
    %cst_73 = arith.constant dense<0.000000e+00> : vector<8x128xf32>
    %94 = tpu.matmul %92, %93, %cst_73 {dimension_numbers = #tpu.dot_dimension_numbers<[1], [0], [0], [1], [0, 0, 1, 1], [], []>} : vector<8x128xf32>, vector<128x128xf32>, vector<8x128xf32> -> vector<8x128xf32>
    %c0_74 = arith.constant 0 : index
    %c0_75 = arith.constant 0 : index
    %95 = vector.load %arg7[%c0_74, %c0_75] : memref<1x128xf32, #tpu.memory_space<vmem>>, vector<1x128xf32>
    %96 = vector.broadcast %95 : vector<1x128xf32> to vector<8x128xf32>
    %97 = arith.addf %94, %96 : vector<8x128xf32>
    %cst_76 = arith.constant 0.000000e+00 : f32
    %98 = vector.broadcast %cst_76 : f32 to vector<8x128xf32>
    %99 = arith.subf %98, %97 : vector<8x128xf32>
    %100 = math.exp %99 : vector<8x128xf32>
    %cst_77 = arith.constant 1.000000e+00 : f32
    %101 = vector.broadcast %cst_77 : f32 to vector<8x128xf32>
    %102 = arith.addf %101, %100 : vector<8x128xf32>
    %103 = tpu.reciprocal %102 : vector<8x128xf32> -> vector<8x128xf32>
    %c0_78 = arith.constant 0 : index
    %c0_79 = arith.constant 0 : index
    %104 = vector.load %arg8[%c0_78, %c0_79] : memref<8x128xf32, #tpu.memory_space<vmem>>, vector<8x128xf32>
    tpu.vector_store %arg8[%c0_78, %c0_79], %103 {strides = array<i32>} : memref<8x128xf32, #tpu.memory_space<vmem>>, vector<8x128xf32>,
    return
  }
  func.func @transform_0(%arg0: i32) -> (i32, i32) {
    %c0_i32 = arith.constant 0 : i32
    %c0_i32_0 = arith.constant 0 : i32
    return %arg0, %c0_i32 : i32, i32
  }
  func.func @transform_1(%arg0: i32) -> (i32, i32) {
    %c0_i32 = arith.constant 0 : i32
    %c0_i32_0 = arith.constant 0 : i32
    %c0_i32_1 = arith.constant 0 : i32
    return %c0_i32, %c0_i32_0 : i32, i32
  }
  func.func @transform_2(%arg0: i32) -> (i32, i32) {
    %c0_i32 = arith.constant 0 : i32
    %c0_i32_0 = arith.constant 0 : i32
    %c0_i32_1 = arith.constant 0 : i32
    return %c0_i32, %c0_i32_0 : i32, i32
  }
  func.func @transform_3(%arg0: i32) -> (i32, i32, i32) {
    %c0_i32 = arith.constant 0 : i32
    %c0_i32_0 = arith.constant 0 : i32
    %c0_i32_1 = arith.constant 0 : i32
    %c0_i32_2 = arith.constant 0 : i32
    return %c0_i32, %c0_i32_0, %c0_i32_1 : i32, i32, i32
  }
  func.func @transform_4(%arg0: i32) -> (i32, i32, i32) {
    %c0_i32 = arith.constant 0 : i32
    %c0_i32_0 = arith.constant 0 : i32
    %c0_i32_1 = arith.constant 0 : i32
    %c0_i32_2 = arith.constant 0 : i32
    return %c0_i32, %c0_i32_0, %c0_i32_1 : i32, i32, i32
  }
  func.func @transform_5(%arg0: i32) -> (i32, i32) {
    %c0_i32 = arith.constant 0 : i32
    %c0_i32_0 = arith.constant 0 : i32
    %c0_i32_1 = arith.constant 0 : i32
    return %c0_i32, %c0_i32_0 : i32, i32
  }
  func.func @transform_6(%arg0: i32) -> (i32, i32) {
    %c0_i32 = arith.constant 0 : i32
    %c0_i32_0 = arith.constant 0 : i32
    %c0_i32_1 = arith.constant 0 : i32
    return %c0_i32, %c0_i32_0 : i32, i32
  }
  func.func @transform_7(%arg0: i32) -> (i32, i32) {
    %c0_i32 = arith.constant 0 : i32
    %c0_i32_0 = arith.constant 0 : i32
    return %arg0, %c0_i32 : i32, i32
  }
}

</mosaic_0001>

<llo_original>
// kernel: tpu_custom_call.1
$region0: #{tpu_custom_call.1}
  #allocation0 [shape = 'u32[]', space=smem, size = 0x4, offset = 0x4, fixed_abs, tag = 'smem constant byte address 0x4 - core index']
  #allocation1 [shape = 'u32[144,128]{1,0:T(1,128)}', space=vmem, size = 0x12000, scoped, tag = 'internal scratch']
  %s0 = inlined_call_operand.hbm [shape: f32[8,32], index: 0, kind: input, shape index: {}]
  %s1 = inlined_call_operand.hbm [shape: f32[32,128], index: 1, kind: input, shape index: {}]
  %s2 = inlined_call_operand.vmem [shape: f32[1,128], index: 2, kind: input, shape index: {}]
  %s3 = inlined_call_operand.hbm [shape: f32[9,128,128], index: 3, kind: input, shape index: {}]
  %s4 = inlined_call_operand.vmem [shape: f32[9,1,128], index: 4, kind: input, shape index: {}]
  %s5 = inlined_call_operand.hbm [shape: f32[128,128], index: 5, kind: input, shape index: {}]
  %s6 = inlined_call_operand.vmem [shape: f32[1,128], index: 6, kind: input, shape index: {}]
  %s7 = inlined_call_operand.hbm [shape: f32[8,128], index: 7, kind: output, shape index: {}]
  %s8 = sld [smem:[#allocation0]]
  $region54: #{tpu_custom_call.1} parent=0
    _
  %s10 = ssub.s32 1, %s8
  %s11 = scalar_select 0, %s10, %s8
  $region1: #{tpu_custom_call.1} parent=0
    #allocation2 [shape = 'u8[4096]{0}', space=vmem, size = 0x1000, scoped, tag = 'input window, operand 0, single buffered']
    #allocation3 [shape = 's32[1]{0}', space=sflag, size = 0x4, scoped, tag = 'scoped memory for tpu_custom_call.1']
    #allocation4 [shape = 's32[1]{0}', space=sflag, size = 0x4, scoped, tag = 'scoped memory for tpu_custom_call.1']
    #allocation5 [shape = 'u8[16384]{0}', space=vmem, size = 0x4000, scoped, tag = 'input window, operand 1, single buffered']
    #allocation6 [shape = 's32[1]{0}', space=sflag, size = 0x4, scoped, tag = 'scoped memory for tpu_custom_call.1']
    #allocation7 [shape = 'u8[589824]{0}', space=vmem, size = 0x90000, scoped, tag = 'input window, operand 3, single buffered']
    #allocation8 [shape = 'u8[65536]{0}', space=vmem, size = 0x10000, scoped, tag = 'input window, operand 5, single buffered']
    #allocation9 [shape = 's32[1]{0}', space=sflag, size = 0x4, scoped, tag = 'scoped memory for tpu_custom_call.1']
    #allocation10 [shape = 'u8[4096]{0}', space=vmem, size = 0x1000, scoped, tag = 'output window, operand 0, single buffered']
    %12 = vsyncpa [#allocation3], 0
    %13 = vsyncpa [#allocation6], 0
    %14 = vsyncpa [#allocation9], 0
    %15 = vsyncpa [#allocation4], 0
    // Predicated region
    $region2: #{tpu_custom_call.1} parent=1 // pred_check
      _
    $region3: #{tpu_custom_call.1} parent=1 // pred_check_branch
      %17 = sbr.rel (0) target = $region5
    $region4: #{tpu_custom_call.1} parent=1 // pred_region
      %s19 = ssub.s32 128, 128
      %20 = vsyncadd [#allocation3], %s19
      %s22 = sshll.u32 [#allocation2], 4
      %s23 = int_to_ptr.vmem [resolvable:$true] %s22
      %25 = dma.hbm_to_vmem [thread:$0]  %s0, 128, %s23, [#allocation3]
    $region5: #{tpu_custom_call.1} parent=1 // pred_fallthru
      _
    // Predicated region
    $region6: #{tpu_custom_call.1} parent=1 // pred_check
      _
    $region7: #{tpu_custom_call.1} parent=1 // pred_check_branch
      %27 = sbr.rel (0) target = $region9
    $region8: #{tpu_custom_call.1} parent=1 // pred_region
      %s29 = ssub.s32 512, 512
      %30 = vsyncadd [#allocation6], %s29
      %s31 = sshll.u32 [#allocation5], 4
      %s32 = int_to_ptr.vmem [resolvable:$true] %s31
      %37 = dma.hbm_to_vmem [thread:$0]  %s1, 512, %s32, [#allocation6], 128, 128, 8
    $region9: #{tpu_custom_call.1} parent=1 // pred_fallthru
      _
    // Predicated region
    $region10: #{tpu_custom_call.1} parent=1 // pred_check
      _
    $region11: #{tpu_custom_call.1} parent=1 // pred_check_branch
      %39 = sbr.rel (0) target = $region13
    $region12: #{tpu_custom_call.1} parent=1 // pred_region
      _
    $region13: #{tpu_custom_call.1} parent=1 // pred_fallthru
      _
    // Predicated region
    $region14: #{tpu_custom_call.1} parent=1 // pred_check
      _
    $region15: #{tpu_custom_call.1} parent=1 // pred_check_branch
      %41 = sbr.rel (0) target = $region17
    $region16: #{tpu_custom_call.1} parent=1 // pred_region
      %s43 = ssub.s32 18432, 18432
      %44 = vsyncadd [#allocation6], %s43
      %s45 = sshll.u32 [#allocation7], 4
      %s46 = int_to_ptr.vmem [resolvable:$true] %s45
      %51 = dma.hbm_to_vmem [thread:$0]  %s3, 18432, %s46, [#allocation6], 128, 128, 8
    $region17: #{tpu_custom_call.1} parent=1 // pred_fallthru
      _
    // Predicated region
    $region18: #{tpu_custom_call.1} parent=1 // pred_check
      _
    $region19: #{tpu_custom_call.1} parent=1 // pred_check_branch
      %53 = sbr.rel (0) target = $region21
    $region20: #{tpu_custom_call.1} parent=1 // pred_region
      _
    $region21: #{tpu_custom_call.1} parent=1 // pred_fallthru
      _
    // Predicated region
    $region22: #{tpu_custom_call.1} parent=1 // pred_check
      _
    $region23: #{tpu_custom_call.1} parent=1 // pred_check_branch
      %55 = sbr.rel (0) target = $region25
    $region24: #{tpu_custom_call.1} parent=1 // pred_region
      %s57 = ssub.s32 2048, 2048
      %58 = vsyncadd [#allocation9], %s57
      %s59 = sshll.u32 [#allocation8], 4
      %s60 = int_to_ptr.vmem [resolvable:$true] %s59
      %65 = dma.hbm_to_vmem [thread:$0]  %s5, 2048, %s60, [#allocation9], 128, 128, 8
    $region25: #{tpu_custom_call.1} parent=1 // pred_fallthru
      _
    // Predicated region
    $region26: #{tpu_custom_call.1} parent=1 // pred_check
      _
    $region27: #{tpu_custom_call.1} parent=1 // pred_check_branch
      %67 = sbr.rel (0) target = $region29
    $region28: #{tpu_custom_call.1} parent=1 // pred_region
      _
    $region29: #{tpu_custom_call.1} parent=1 // pred_fallthru
      _
    // Predicated region
    $region30: #{tpu_custom_call.1} parent=1 // pred_check
      _
    $region31: #{tpu_custom_call.1} parent=1 // pred_check_branch
      %69 = sbr.rel (0) target = $region33
    $region32: #{tpu_custom_call.1} parent=1 // pred_region
      %70 = dma.done [#allocation3], 128
    $region33: #{tpu_custom_call.1} parent=1 // pred_fallthru
      _
    // Predicated region
    $region34: #{tpu_custom_call.1} parent=1 // pred_check
      _
    $region35: #{tpu_custom_call.1} parent=1 // pred_check_branch
      %72 = sbr.rel (0) target = $region37
    $region36: #{tpu_custom_call.1} parent=1 // pred_region
      %73 = dma.done [#allocation6], 512
    $region37: #{tpu_custom_call.1} parent=1 // pred_fallthru
      _
    // Predicated region
    $region38: #{tpu_custom_call.1} parent=1 // pred_check
      _
    $region39: #{tpu_custom_call.1} parent=1 // pred_check_branch
      %75 = sbr.rel (0) target = $region41
    $region40: #{tpu_custom_call.1} parent=1 // pred_region
      %76 = dma.done [#allocation6], 18432
    $region41: #{tpu_custom_call.1} parent=1 // pred_fallthru
      _
    // Predicated region
    $region42: #{tpu_custom_call.1} parent=1 // pred_check
      _
    $region43: #{tpu_custom_call.1} parent=1 // pred_check_branch
      %78 = sbr.rel (0) target = $region45
    $region44: #{tpu_custom_call.1} parent=1 // pred_region
      %79 = dma.done [#allocation9], 2048
    $region45: #{tpu_custom_call.1} parent=1 // pred_fallthru
      _
    %v80 = vld [vmem:[#allocation2] sm:$0xff]
    %v81 = vld [vmem:[#allocation5] sm:$0xff]
    %v82 = vld [vmem:[#allocation5 + $0x8] sm:$0xff]
    %v83 = vld [vmem:[#allocation5 + $0x10] sm:$0xff]
    %v84 = vld [vmem:[#allocation5 + $0x18] sm:$0xff]
    %v85 = vld [vmem:[%s2] sm:$0x1]
    %v87 = vlaneseq
    %v88 = vshrl.u32 %v87, 7
    %v89 = vsub.s32 0, %v88
    %v90 = vrot.slane %v85, %v89
    %vm92 = vcmask 261120
    %v94 = vsel %vm92, %v80, 0
    %96 = vmatprep.subr.mxu0 0.0
    %97 = vmatpush1.msra.mxu0 %v81
    %98 = vmatprep.subr.mxu0 0.0
    %99 = vmatpush1.msra.mxu0 %v82
    %100 = vmatprep.subr.mxu0 0.0
    %101 = vmatpush1.msra.mxu0 %v83
    %102 = vmatprep.subr.mxu0 0.0
    %103 = vmatpush1.msra.mxu0 %v84
    %104 = vmatprep.subr.mxu0 0.0
    %105 = vmatpush1.msra.mxu0 0.0
    %106 = vmatprep.subr.mxu0 0.0
    %107 = vmatpush1.msra.mxu0 0.0
    %108 = vmatprep.subr.mxu0 0.0
    %109 = vmatpush1.msra.mxu0 0.0
    %110 = vmatprep.subr.mxu0 0.0
    %111 = vmatpush1.msra.mxu0 0.0
    %112 = vmatprep.subr.mxu0 0.0
    %113 = vmatpush1.msra.mxu0 0.0
    %114 = vmatprep.subr.mxu0 0.0
    %115 = vmatpush1.msra.mxu0 0.0
    %116 = vmatprep.subr.mxu0 0.0
    %117 = vmatpush1.msra.mxu0 0.0
    %118 = vmatprep.subr.mxu0 0.0
    %119 = vmatpush1.msra.mxu0 0.0
    %120 = vmatprep.subr.mxu0 0.0
    %121 = vmatpush1.msra.mxu0 0.0
    %122 = vmatprep.subr.mxu0 0.0
    %123 = vmatpush1.msra.mxu0 0.0
    %124 = vmatprep.subr.mxu0 0.0
    %125 = vmatpush1.msra.mxu0 0.0
    %126 = vmatprep.subr.mxu0 0.0
    %127 = vmatpush1.msra.mxu0 0.0
    %128 = vmatprep.subr.mxu0 0.0
    %129 = vmatpush1.msra.mxu0 0.0
    %130 = vmatprep.subr.mxu0 0.0
    %131 = vmatpush1.msra.mxu0 0.0
    %132 = vmatprep.subr.mxu0 0.0
    %133 = vmatpush1.msra.mxu0 0.0
    %134 = vmatprep.subr.mxu0 0.0
    %135 = vmatpush1.msra.mxu0 0.0
    %136 = vmatprep.subr.mxu0 0.0
    %137 = vmatpush1.msra.mxu0 0.0
    %138 = vmatprep.subr.mxu0 0.0
    %139 = vmatpush1.msra.mxu0 0.0
    %140 = vmatprep.subr.mxu0 0.0
    %141 = vmatpush1.msra.mxu0 0.0
    %142 = vmatprep.subr.mxu0 0.0
    %143 = vmatpush1.msra.mxu0 0.0
    %144 = vmatprep.subr.mxu0 0.0
    %145 = vmatpush1.msra.mxu0 0.0
    %146 = vmatprep.subr.mxu0 0.0
    %147 = vmatpush1.msra.mxu0 0.0
    %148 = vmatprep.subr.mxu0 0.0
    %149 = vmatpush1.msra.mxu0 0.0
    %150 = vmatprep.subr.mxu0 0.0
    %151 = vmatpush1.msra.mxu0 0.0
    %152 = vmatprep.subr.mxu0 0.0
    %153 = vmatpush1.msra.mxu0 0.0
    %154 = vmatprep.subr.mxu0 0.0
    %155 = vmatpush1.msra.mxu0 0.0
    %156 = vmatprep.subr.mxu0 0.0
    %157 = vmatpush1.msra.mxu0 0.0
    %158 = vmatprep.subr.mxu0 0.0
    %159 = vmatpush1.msra.mxu0 0.0
    %160 = vmatprep.mubr.f32.mxu0 0.0
    %161 = vmatmul.mubr.f32.gmra.mrb[0].mxu0 %v94
    %v162 = vpop.f32.mrb[0].mxu0
    %v163 = vadd.f32 %v90, %v162
    %v164 = vpop.f32.mrb[0].mxu0
    %165 = vdwg.mxu0
    %v166 = vsub.f32 0.0, %v163
    %v167 = vmul.f32 %v166, 1.442695
    %v168 = vpow.pop %v167
    %v169 = vadd.f32 %v168, 1.0
    %v170 = vrcp.pop %v169
    %v171 = vld [vmem:[#allocation7] sm:$0xff]
    %v172 = vld [vmem:[#allocation7 + $0x8] sm:$0xff]
    %v173 = vld [vmem:[#allocation7 + $0x10] sm:$0xff]
    %v174 = vld [vmem:[#allocation7 + $0x18] sm:$0xff]
    %v175 = vld [vmem:[#allocation7 + $0x20] sm:$0xff]
    %v176 = vld [vmem:[#allocation7 + $0x28] sm:$0xff]
    %v177 = vld [vmem:[#allocation7 + $0x30] sm:$0xff]
    %v178 = vld [vmem:[#allocation7 + $0x38] sm:$0xff]
    %v179 = vld [vmem:[#allocation7 + $0x40] sm:$0xff]
    %v180 = vld [vmem:[#allocation7 + $0x48] sm:$0xff]
    %v181 = vld [vmem:[#allocation7 + $0x50] sm:$0xff]
    %v182 = vld [vmem:[#allocation7 + $0x58] sm:$0xff]
    %v183 = vld [vmem:[#allocation7 + $0x60] sm:$0xff]
    %v184 = vld [vmem:[#allocation7 + $0x68] sm:$0xff]
    %v185 = vld [vmem:[#allocation7 + $0x70] sm:$0xff]
    %v186 = vld [vmem:[#allocation7 + $0x78] sm:$0xff]
    %v187 = vld [vmem:[%s4] sm:$0x1]
    %v189 = vlaneseq
    %v190 = vshrl.u32 %v189, 7
    %v191 = vsub.s32 0, %v190
    %v192 = vrot.slane %v187, %v191
    %194 = vmatprep.subr.mxu0 0.0
    %195 = vmatpush1.msra.mxu0 %v171
    %196 = vmatprep.subr.mxu0 0.0
    %197 = vmatpush1.msra.mxu0 %v172
    %198 = vmatprep.subr.mxu0 0.0
    %199 = vmatpush1.msra.mxu0 %v173
    %200 = vmatprep.subr.mxu0 0.0
    %201 = vmatpush1.msra.mxu0 %v174
    %202 = vmatprep.subr.mxu0 0.0
    %203 = vmatpush1.msra.mxu0 %v175
    %204 = vmatprep.subr.mxu0 0.0
    %205 = vmatpush1.msra.mxu0 %v176
    %206 = vmatprep.subr.mxu0 0.0
    %207 = vmatpush1.msra.mxu0 %v177
    %208 = vmatprep.subr.mxu0 0.0
    %209 = vmatpush1.msra.mxu0 %v178
    %210 = vmatprep.subr.mxu0 0.0
    %211 = vmatpush1.msra.mxu0 %v179
    %212 = vmatprep.subr.mxu0 0.0
    %213 = vmatpush1.msra.mxu0 %v180
    %214 = vmatprep.subr.mxu0 0.0
    %215 = vmatpush1.msra.mxu0 %v181
    %216 = vmatprep.subr.mxu0 0.0
    %217 = vmatpush1.msra.mxu0 %v182
    %218 = vmatprep.subr.mxu0 0.0
    %219 = vmatpush1.msra.mxu0 %v183
    %220 = vmatprep.subr.mxu0 0.0
    %221 = vmatpush1.msra.mxu0 %v184
    %222 = vmatprep.subr.mxu0 0.0
    %223 = vmatpush1.msra.mxu0 %v185
    %224 = vmatprep.subr.mxu0 0.0
    %225 = vmatpush1.msra.mxu0 %v186
    %226 = vmatprep.subr.mxu0 0.0
    %227 = vmatpush1.msra.mxu0 0.0
    %228 = vmatprep.subr.mxu0 0.0
    %229 = vmatpush1.msra.mxu0 0.0
    %230 = vmatprep.subr.mxu0 0.0
    %231 = vmatpush1.msra.mxu0 0.0
    %232 = vmatprep.subr.mxu0 0.0
    %233 = vmatpush1.msra.mxu0 0.0
    %234 = vmatprep.subr.mxu0 0.0
    %235 = vmatpush1.msra.mxu0 0.0
    %236 = vmatprep.subr.mxu0 0.0
    %237 = vmatpush1.msra.mxu0 0.0
    %238 = vmatprep.subr.mxu0 0.0
    %239 = vmatpush1.msra.mxu0 0.0
    %240 = vmatprep.subr.mxu0 0.0
    %241 = vmatpush1.msra.mxu0 0.0
    %242 = vmatprep.subr.mxu0 0.0
    %243 = vmatpush1.msra.mxu0 0.0
    %244 = vmatprep.subr.mxu0 0.0
    %245 = vmatpush1.msra.mxu0 0.0
    %246 = vmatprep.subr.mxu0 0.0
    %247 = vmatpush1.msra.mxu0 0.0
    %248 = vmatprep.subr.mxu0 0.0
    %249 = vmatpush1.msra.mxu0 0.0
    %250 = vmatprep.subr.mxu0 0.0
    %251 = vmatpush1.msra.mxu0 0.0
    %252 = vmatprep.subr.mxu0 0.0
    %253 = vmatpush1.msra.mxu0 0.0
    %254 = vmatprep.subr.mxu0 0.0
    %255 = vmatpush1.msra.mxu0 0.0
    %256 = vmatprep.subr.mxu0 0.0
    %257 = vmatpush1.msra.mxu0 0.0
    %258 = vmatprep.mubr.f32.mxu0 0.0
    %259 = vmatmul.mubr.f32.gmra.mrb[0].mxu0 %v170
    %v260 = vpop.f32.mrb[0].mxu0
    %v261 = vadd.f32 %v192, %v260
    %v262 = vpop.f32.mrb[0].mxu0
    %263 = vdwg.mxu0
    %v264 = vmax.f32 %v261, 0.0
    %s265 = scalar_lea.vmem [#allocation7], 128
    %v266 = vld [vmem:[%s265] sm:$0xff]
    %v267 = vld [vmem:[%s265 + $0x8] sm:$0xff]
    %v268 = vld [vmem:[%s265 + $0x10] sm:$0xff]
    %v269 = vld [vmem:[%s265 + $0x18] sm:$0xff]
    %v270 = vld [vmem:[%s265 + $0x20] sm:$0xff]
    %v271 = vld [vmem:[%s265 + $0x28] sm:$0xff]
    %v272 = vld [vmem:[%s265 + $0x30] sm:$0xff]
    %v273 = vld [vmem:[%s265 + $0x38] sm:$0xff]
    %v274 = vld [vmem:[%s265 + $0x40] sm:$0xff]
    %v275 = vld [vmem:[%s265 + $0x48] sm:$0xff]
    %v276 = vld [vmem:[%s265 + $0x50] sm:$0xff]
    %v277 = vld [vmem:[%s265 + $0x58] sm:$0xff]
    %v278 = vld [vmem:[%s265 + $0x60] sm:$0xff]
    %v279 = vld [vmem:[%s265 + $0x68] sm:$0xff]
    %v280 = vld [vmem:[%s265 + $0x70] sm:$0xff]
    %v281 = vld [vmem:[%s265 + $0x78] sm:$0xff]
    %s282 = scalar_lea.vmem %s4, 1
    %v283 = vld [vmem:[%s282] sm:$0x1]
    %v285 = vlaneseq
    %v286 = vshrl.u32 %v285, 7
    %v287 = vsub.s32 0, %v286
    %v288 = vrot.slane %v283, %v287
    %290 = vmatprep.subr.mxu0 0.0
    %291 = vmatpush1.msra.mxu0 %v266
    %292 = vmatprep.subr.mxu0 0.0
    %293 = vmatpush1.msra.mxu0 %v267
    %294 = vmatprep.subr.mxu0 0.0
    %295 = vmatpush1.msra.mxu0 %v268
    %296 = vmatprep.subr.mxu0 0.0
    %297 = vmatpush1.msra.mxu0 %v269
    %298 = vmatprep.subr.mxu0 0.0
    %299 = vmatpush1.msra.mxu0 %v270
    %300 = vmatprep.subr.mxu0 0.0
    %301 = vmatpush1.msra.mxu0 %v271
    %302 = vmatprep.subr.mxu0 0.0
    %303 = vmatpush1.msra.mxu0 %v272
    %304 = vmatprep.subr.mxu0 0.0
    %305 = vmatpush1.msra.mxu0 %v273
    %306 = vmatprep.subr.mxu0 0.0
    %307 = vmatpush1.msra.mxu0 %v274
    %308 = vmatprep.subr.mxu0 0.0
    %309 = vmatpush1.msra.mxu0 %v275
    %310 = vmatprep.subr.mxu0 0.0
    %311 = vmatpush1.msra.mxu0 %v276
    %312 = vmatprep.subr.mxu0 0.0
    %313 = vmatpush1.msra.mxu0 %v277
    %314 = vmatprep.subr.mxu0 0.0
    %315 = vmatpush1.msra.mxu0 %v278
    %316 = vmatprep.subr.mxu0 0.0
    %317 = vmatpush1.msra.mxu0 %v279
    %318 = vmatprep.subr.mxu0 0.0
    %319 = vmatpush1.msra.mxu0 %v280
    %320 = vmatprep.subr.mxu0 0.0
    %321 = vmatpush1.msra.mxu0 %v281
    %322 = vmatprep.subr.mxu0 0.0
    %323 = vmatpush1.msra.mxu0 0.0
    %324 = vmatprep.subr.mxu0 0.0
    %325 = vmatpush1.msra.mxu0 0.0
    %326 = vmatprep.subr.mxu0 0.0
    %327 = vmatpush1.msra.mxu0 0.0
    %328 = vmatprep.subr.mxu0 0.0
    %329 = vmatpush1.msra.mxu0 0.0
    %330 = vmatprep.subr.mxu0 0.0
    %331 = vmatpush1.msra.mxu0 0.0
    %332 = vmatprep.subr.mxu0 0.0
    %333 = vmatpush1.msra.mxu0 0.0
    %334 = vmatprep.subr.mxu0 0.0
    %335 = vmatpush1.msra.mxu0 0.0
    %336 = vmatprep.subr.mxu0 0.0
    %337 = vmatpush1.msra.mxu0 0.0
    %338 = vmatprep.subr.mxu0 0.0
    %339 = vmatpush1.msra.mxu0 0.0
    %340 = vmatprep.subr.mxu0 0.0
    %341 = vmatpush1.msra.mxu0 0.0
    %342 = vmatprep.subr.mxu0 0.0
    %343 = vmatpush1.msra.mxu0 0.0
    %344 = vmatprep.subr.mxu0 0.0
    %345 = vmatpush1.msra.mxu0 0.0
    %346 = vmatprep.subr.mxu0 0.0
    %347 = vmatpush1.msra.mxu0 0.0
    %348 = vmatprep.subr.mxu0 0.0
    %349 = vmatpush1.msra.mxu0 0.0
    %350 = vmatprep.subr.mxu0 0.0
    %351 = vmatpush1.msra.mxu0 0.0
    %352 = vmatprep.subr.mxu0 0.0
    %353 = vmatpush1.msra.mxu0 0.0
    %354 = vmatprep.mubr.f32.mxu0 0.0
    %355 = vmatmul.mubr.f32.gmra.mrb[0].mxu0 %v264
    %v356 = vpop.f32.mrb[0].mxu0
    %v357 = vadd.f32 %v288, %v356
    %v358 = vpop.f32.mrb[0].mxu0
    %359 = vdwg.mxu0
    %v360 = vmax.f32 %v357, 0.0
    %s361 = scalar_lea.vmem [#allocation7], 256
    %v362 = vld [vmem:[%s361] sm:$0xff]
    %v363 = vld [vmem:[%s361 + $0x8] sm:$0xff]
    %v364 = vld [vmem:[%s361 + $0x10] sm:$0xff]
    %v365 = vld [vmem:[%s361 + $0x18] sm:$0xff]
    %v366 = vld [vmem:[%s361 + $0x20] sm:$0xff]
    %v367 = vld [vmem:[%s361 + $0x28] sm:$0xff]
    %v368 = vld [vmem:[%s361 + $0x30] sm:$0xff]
    %v369 = vld [vmem:[%s361 + $0x38] sm:$0xff]
    %v370 = vld [vmem:[%s361 + $0x40] sm:$0xff]
    %v371 = vld [vmem:[%s361 + $0x48] sm:$0xff]
    %v372 = vld [vmem:[%s361 + $0x50] sm:$0xff]
    %v373 = vld [vmem:[%s361 + $0x58] sm:$0xff]
    %v374 = vld [vmem:[%s361 + $0x60] sm:$0xff]
    %v375 = vld [vmem:[%s361 + $0x68] sm:$0xff]
    %v376 = vld [vmem:[%s361 + $0x70] sm:$0xff]
    %v377 = vld [vmem:[%s361 + $0x78] sm:$0xff]
    %s378 = scalar_lea.vmem %s4, 2
    %v379 = vld [vmem:[%s378] sm:$0x1]
    %v381 = vlaneseq
    %v382 = vshrl.u32 %v381, 7
    %v383 = vsub.s32 0, %v382
    %v384 = vrot.slane %v379, %v383
    %386 = vmatprep.subr.mxu0 0.0
    %387 = vmatpush1.msra.mxu0 %v362
    %388 = vmatprep.subr.mxu0 0.0
    %389 = vmatpush1.msra.mxu0 %v363
    %390 = vmatprep.subr.mxu0 0.0
    %391 = vmatpush1.msra.mxu0 %v364
    %392 = vmatprep.subr.mxu0 0.0
    %393 = vmatpush1.msra.mxu0 %v365
    %394 = vmatprep.subr.mxu0 0.0
    %395 = vmatpush1.msra.mxu0 %v366
    %396 = vmatprep.subr.mxu0 0.0
    %397 = vmatpush1.msra.mxu0 %v367
    %398 = vmatprep.subr.mxu0 0.0
    %399 = vmatpush1.msra.mxu0 %v368
    %400 = vmatprep.subr.mxu0 0.0
    %401 = vmatpush1.msra.mxu0 %v369
    %402 = vmatprep.subr.mxu0 0.0
    %403 = vmatpush1.msra.mxu0 %v370
    %404 = vmatprep.subr.mxu0 0.0
    %405 = vmatpush1.msra.mxu0 %v371
    %406 = vmatprep.subr.mxu0 0.0
    %407 = vmatpush1.msra.mxu0 %v372
    %408 = vmatprep.subr.mxu0 0.0
    %409 = vmatpush1.msra.mxu0 %v373
    %410 = vmatprep.subr.mxu0 0.0
    %411 = vmatpush1.msra.mxu0 %v374
    %412 = vmatprep.subr.mxu0 0.0
    %413 = vmatpush1.msra.mxu0 %v375
    %414 = vmatprep.subr.mxu0 0.0
    %415 = vmatpush1.msra.mxu0 %v376
    %416 = vmatprep.subr.mxu0 0.0
    %417 = vmatpush1.msra.mxu0 %v377
    %418 = vmatprep.subr.mxu0 0.0
    %419 = vmatpush1.msra.mxu0 0.0
    %420 = vmatprep.subr.mxu0 0.0
    %421 = vmatpush1.msra.mxu0 0.0
    %422 = vmatprep.subr.mxu0 0.0
    %423 = vmatpush1.msra.mxu0 0.0
    %424 = vmatprep.subr.mxu0 0.0
    %425 = vmatpush1.msra.mxu0 0.0
    %426 = vmatprep.subr.mxu0 0.0
    %427 = vmatpush1.msra.mxu0 0.0
    %428 = vmatprep.subr.mxu0 0.0
    %429 = vmatpush1.msra.mxu0 0.0
    %430 = vmatprep.subr.mxu0 0.0
    %431 = vmatpush1.msra.mxu0 0.0
    %432 = vmatprep.subr.mxu0 0.0
    %433 = vmatpush1.msra.mxu0 0.0
    %434 = vmatprep.subr.mxu0 0.0
    %435 = vmatpush1.msra.mxu0 0.0
    %436 = vmatprep.subr.mxu0 0.0
    %437 = vmatpush1.msra.mxu0 0.0
    %438 = vmatprep.subr.mxu0 0.0
    %439 = vmatpush1.msra.mxu0 0.0
    %440 = vmatprep.subr.mxu0 0.0
    %441 = vmatpush1.msra.mxu0 0.0
    %442 = vmatprep.subr.mxu0 0.0
    %443 = vmatpush1.msra.mxu0 0.0
    %444 = vmatprep.subr.mxu0 0.0
    %445 = vmatpush1.msra.mxu0 0.0
    %446 = vmatprep.subr.mxu0 0.0
    %447 = vmatpush1.msra.mxu0 0.0
    %448 = vmatprep.subr.mxu0 0.0
    %449 = vmatpush1.msra.mxu0 0.0
    %450 = vmatprep.mubr.f32.mxu0 0.0
    %451 = vmatmul.mubr.f32.gmra.mrb[0].mxu0 %v360
    %v452 = vpop.f32.mrb[0].mxu0
    %v453 = vadd.f32 %v384, %v452
    %v454 = vpop.f32.mrb[0].mxu0
    %455 = vdwg.mxu0
    %v456 = vmax.f32 %v453, 0.0
    %s457 = scalar_lea.vmem [#allocation7], 384
    %v458 = vld [vmem:[%s457] sm:$0xff]
    %v459 = vld [vmem:[%s457 + $0x8] sm:$0xff]
    %v460 = vld [vmem:[%s457 + $0x10] sm:$0xff]
    %v461 = vld [vmem:[%s457 + $0x18] sm:$0xff]
    %v462 = vld [vmem:[%s457 + $0x20] sm:$0xff]
    %v463 = vld [vmem:[%s457 + $0x28] sm:$0xff]
    %v464 = vld [vmem:[%s457 + $0x30] sm:$0xff]
    %v465 = vld [vmem:[%s457 + $0x38] sm:$0xff]
    %v466 = vld [vmem:[%s457 + $0x40] sm:$0xff]
    %v467 = vld [vmem:[%s457 + $0x48] sm:$0xff]
    %v468 = vld [vmem:[%s457 + $0x50] sm:$0xff]
    %v469 = vld [vmem:[%s457 + $0x58] sm:$0xff]
    %v470 = vld [vmem:[%s457 + $0x60] sm:$0xff]
    %v471 = vld [vmem:[%s457 + $0x68] sm:$0xff]
    %v472 = vld [vmem:[%s457 + $0x70] sm:$0xff]
    %v473 = vld [vmem:[%s457 + $0x78] sm:$0xff]
    %s474 = scalar_lea.vmem %s4, 3
    %v475 = vld [vmem:[%s474] sm:$0x1]
    %v477 = vlaneseq
    %v478 = vshrl.u32 %v477, 7
    %v479 = vsub.s32 0, %v478
    %v480 = vrot.slane %v475, %v479
    %482 = vmatprep.subr.mxu0 0.0
    %483 = vmatpush1.msra.mxu0 %v458
    %484 = vmatprep.subr.mxu0 0.0
    %485 = vmatpush1.msra.mxu0 %v459
    %486 = vmatprep.subr.mxu0 0.0
    %487 = vmatpush1.msra.mxu0 %v460
    %488 = vmatprep.subr.mxu0 0.0
    %489 = vmatpush1.msra.mxu0 %v461
    %490 = vmatprep.subr.mxu0 0.0
    %491 = vmatpush1.msra.mxu0 %v462
    %492 = vmatprep.subr.mxu0 0.0
    %493 = vmatpush1.msra.mxu0 %v463
    %494 = vmatprep.subr.mxu0 0.0
    %495 = vmatpush1.msra.mxu0 %v464
    %496 = vmatprep.subr.mxu0 0.0
    %497 = vmatpush1.msra.mxu0 %v465
    %498 = vmatprep.subr.mxu0 0.0
    %499 = vmatpush1.msra.mxu0 %v466
    %500 = vmatprep.subr.mxu0 0.0
    %501 = vmatpush1.msra.mxu0 %v467
    %502 = vmatprep.subr.mxu0 0.0
    %503 = vmatpush1.msra.mxu0 %v468
    %504 = vmatprep.subr.mxu0 0.0
    %505 = vmatpush1.msra.mxu0 %v469
    %506 = vmatprep.subr.mxu0 0.0
    %507 = vmatpush1.msra.mxu0 %v470
    %508 = vmatprep.subr.mxu0 0.0
    %509 = vmatpush1.msra.mxu0 %v471
    %510 = vmatprep.subr.mxu0 0.0
    %511 = vmatpush1.msra.mxu0 %v472
    %512 = vmatprep.subr.mxu0 0.0
    %513 = vmatpush1.msra.mxu0 %v473
    %514 = vmatprep.subr.mxu0 0.0
    %515 = vmatpush1.msra.mxu0 0.0
    %516 = vmatprep.subr.mxu0 0.0
    %517 = vmatpush1.msra.mxu0 0.0
    %518 = vmatprep.subr.mxu0 0.0
    %519 = vmatpush1.msra.mxu0 0.0
    %520 = vmatprep.subr.mxu0 0.0
    %521 = vmatpush1.msra.mxu0 0.0
    %522 = vmatprep.subr.mxu0 0.0
    %523 = vmatpush1.msra.mxu0 0.0
    %524 = vmatprep.subr.mxu0 0.0
    %525 = vmatpush1.msra.mxu0 0.0
    %526 = vmatprep.subr.mxu0 0.0
    %527 = vmatpush1.msra.mxu0 0.0
    %528 = vmatprep.subr.mxu0 0.0
    %529 = vmatpush1.msra.mxu0 0.0
    %530 = vmatprep.subr.mxu0 0.0
    %531 = vmatpush1.msra.mxu0 0.0
    %532 = vmatprep.subr.mxu0 0.0
    %533 = vmatpush1.msra.mxu0 0.0
    %534 = vmatprep.subr.mxu0 0.0
    %535 = vmatpush1.msra.mxu0 0.0
    %536 = vmatprep.subr.mxu0 0.0
    %537 = vmatpush1.msra.mxu0 0.0
    %538 = vmatprep.subr.mxu0 0.0
    %539 = vmatpush1.msra.mxu0 0.0
    %540 = vmatprep.subr.mxu0 0.0
    %541 = vmatpush1.msra.mxu0 0.0
    %542 = vmatprep.subr.mxu0 0.0
    %543 = vmatpush1.msra.mxu0 0.0
    %544 = vmatprep.subr.mxu0 0.0
    %545 = vmatpush1.msra.mxu0 0.0
    %546 = vmatprep.mubr.f32.mxu0 0.0
    %547 = vmatmul.mubr.f32.gmra.mrb[0].mxu0 %v456
    %v548 = vpop.f32.mrb[0].mxu0
    %v549 = vadd.f32 %v480, %v548
    %v550 = vpop.f32.mrb[0].mxu0
    %551 = vdwg.mxu0
    %v552 = vmax.f32 %v549, 0.0
    %s553 = scalar_lea.vmem [#allocation7], 512
    %v554 = vld [vmem:[%s553] sm:$0xff]
    %v555 = vld [vmem:[%s553 + $0x8] sm:$0xff]
    %v556 = vld [vmem:[%s553 + $0x10] sm:$0xff]
    %v557 = vld [vmem:[%s553 + $0x18] sm:$0xff]
    %v558 = vld [vmem:[%s553 + $0x20] sm:$0xff]
    %v559 = vld [vmem:[%s553 + $0x28] sm:$0xff]
    %v560 = vld [vmem:[%s553 + $0x30] sm:$0xff]
    %v561 = vld [vmem:[%s553 + $0x38] sm:$0xff]
    %v562 = vld [vmem:[%s553 + $0x40] sm:$0xff]
    %v563 = vld [vmem:[%s553 + $0x48] sm:$0xff]
    %v564 = vld [vmem:[%s553 + $0x50] sm:$0xff]
    %v565 = vld [vmem:[%s553 + $0x58] sm:$0xff]
    %v566 = vld [vmem:[%s553 + $0x60] sm:$0xff]
    %v567 = vld [vmem:[%s553 + $0x68] sm:$0xff]
    %v568 = vld [vmem:[%s553 + $0x70] sm:$0xff]
    %v569 = vld [vmem:[%s553 + $0x78] sm:$0xff]
    %s570 = scalar_lea.vmem %s4, 4
    %v571 = vld [vmem:[%s570] sm:$0x1]
    %v573 = vlaneseq
    %v574 = vshrl.u32 %v573, 7
    %v575 = vsub.s32 0, %v574
    %v576 = vrot.slane %v571, %v575
    %578 = vmatprep.subr.mxu0 0.0
    %579 = vmatpush1.msra.mxu0 %v554
    %580 = vmatprep.subr.mxu0 0.0
    %581 = vmatpush1.msra.mxu0 %v555
    %582 = vmatprep.subr.mxu0 0.0
    %583 = vmatpush1.msra.mxu0 %v556
    %584 = vmatprep.subr.mxu0 0.0
    %585 = vmatpush1.msra.mxu0 %v557
    %586 = vmatprep.subr.mxu0 0.0
    %587 = vmatpush1.msra.mxu0 %v558
    %588 = vmatprep.subr.mxu0 0.0
    %589 = vmatpush1.msra.mxu0 %v559
    %590 = vmatprep.subr.mxu0 0.0
    %591 = vmatpush1.msra.mxu0 %v560
    %592 = vmatprep.subr.mxu0 0.0
    %593 = vmatpush1.msra.mxu0 %v561
    %594 = vmatprep.subr.mxu0 0.0
    %595 = vmatpush1.msra.mxu0 %v562
    %596 = vmatprep.subr.mxu0 0.0
    %597 = vmatpush1.msra.mxu0 %v563
    %598 = vmatprep.subr.mxu0 0.0
    %599 = vmatpush1.msra.mxu0 %v564
    %600 = vmatprep.subr.mxu0 0.0
    %601 = vmatpush1.msra.mxu0 %v565
    %602 = vmatprep.subr.mxu0 0.0
    %603 = vmatpush1.msra.mxu0 %v566
    %604 = vmatprep.subr.mxu0 0.0
    %605 = vmatpush1.msra.mxu0 %v567
    %606 = vmatprep.subr.mxu0 0.0
    %607 = vmatpush1.msra.mxu0 %v568
    %608 = vmatprep.subr.mxu0 0.0
    %609 = vmatpush1.msra.mxu0 %v569
    %610 = vmatprep.subr.mxu0 0.0
    %611 = vmatpush1.msra.mxu0 0.0
    %612 = vmatprep.subr.mxu0 0.0
    %613 = vmatpush1.msra.mxu0 0.0
    %614 = vmatprep.subr.mxu0 0.0
    %615 = vmatpush1.msra.mxu0 0.0
    %616 = vmatprep.subr.mxu0 0.0
    %617 = vmatpush1.msra.mxu0 0.0
    %618 = vmatprep.subr.mxu0 0.0
    %619 = vmatpush1.msra.mxu0 0.0
    %620 = vmatprep.subr.mxu0 0.0
    %621 = vmatpush1.msra.mxu0 0.0
    %622 = vmatprep.subr.mxu0 0.0
    %623 = vmatpush1.msra.mxu0 0.0
    %624 = vmatprep.subr.mxu0 0.0
    %625 = vmatpush1.msra.mxu0 0.0
    %626 = vmatprep.subr.mxu0 0.0
    %627 = vmatpush1.msra.mxu0 0.0
    %628 = vmatprep.subr.mxu0 0.0
    %629 = vmatpush1.msra.mxu0 0.0
    %630 = vmatprep.subr.mxu0 0.0
    %631 = vmatpush1.msra.mxu0 0.0
    %632 = vmatprep.subr.mxu0 0.0
    %633 = vmatpush1.msra.mxu0 0.0
    %634 = vmatprep.subr.mxu0 0.0
    %635 = vmatpush1.msra.mxu0 0.0
    %636 = vmatprep.subr.mxu0 0.0
    %637 = vmatpush1.msra.mxu0 0.0
    %638 = vmatprep.subr.mxu0 0.0
    %639 = vmatpush1.msra.mxu0 0.0
    %640 = vmatprep.subr.mxu0 0.0
    %641 = vmatpush1.msra.mxu0 0.0
    %642 = vmatprep.mubr.f32.mxu0 0.0
    %643 = vmatmul.mubr.f32.gmra.mrb[0].mxu0 %v552
    %v644 = vpop.f32.mrb[0].mxu0
    %v645 = vadd.f32 %v576, %v644
    %v646 = vpop.f32.mrb[0].mxu0
    %647 = vdwg.mxu0
    %v648 = vmax.f32 %v645, 0.0
    %s649 = scalar_lea.vmem [#allocation7], 640
    %v650 = vld [vmem:[%s649] sm:$0xff]
    %v651 = vld [vmem:[%s649 + $0x8] sm:$0xff]
    %v652 = vld [vmem:[%s649 + $0x10] sm:$0xff]
    %v653 = vld [vmem:[%s649 + $0x18] sm:$0xff]
    %v654 = vld [vmem:[%s649 + $0x20] sm:$0xff]
    %v655 = vld [vmem:[%s649 + $0x28] sm:$0xff]
    %v656 = vld [vmem:[%s649 + $0x30] sm:$0xff]
    %v657 = vld [vmem:[%s649 + $0x38] sm:$0xff]
    %v658 = vld [vmem:[%s649 + $0x40] sm:$0xff]
    %v659 = vld [vmem:[%s649 + $0x48] sm:$0xff]
    %v660 = vld [vmem:[%s649 + $0x50] sm:$0xff]
    %v661 = vld [vmem:[%s649 + $0x58] sm:$0xff]
    %v662 = vld [vmem:[%s649 + $0x60] sm:$0xff]
    %v663 = vld [vmem:[%s649 + $0x68] sm:$0xff]
    %v664 = vld [vmem:[%s649 + $0x70] sm:$0xff]
    %v665 = vld [vmem:[%s649 + $0x78] sm:$0xff]
    %s666 = scalar_lea.vmem %s4, 5
    %v667 = vld [vmem:[%s666] sm:$0x1]
    %v669 = vlaneseq
    %v670 = vshrl.u32 %v669, 7
    %v671 = vsub.s32 0, %v670
    %v672 = vrot.slane %v667, %v671
    %674 = vmatprep.subr.mxu0 0.0
    %675 = vmatpush1.msra.mxu0 %v650
    %676 = vmatprep.subr.mxu0 0.0
    %677 = vmatpush1.msra.mxu0 %v651
    %678 = vmatprep.subr.mxu0 0.0
    %679 = vmatpush1.msra.mxu0 %v652
    %680 = vmatprep.subr.mxu0 0.0
    %681 = vmatpush1.msra.mxu0 %v653
    %682 = vmatprep.subr.mxu0 0.0
    %683 = vmatpush1.msra.mxu0 %v654
    %684 = vmatprep.subr.mxu0 0.0
    %685 = vmatpush1.msra.mxu0 %v655
    %686 = vmatprep.subr.mxu0 0.0
    %687 = vmatpush1.msra.mxu0 %v656
    %688 = vmatprep.subr.mxu0 0.0
    %689 = vmatpush1.msra.mxu0 %v657
    %690 = vmatprep.subr.mxu0 0.0
    %691 = vmatpush1.msra.mxu0 %v658
    %692 = vmatprep.subr.mxu0 0.0
    %693 = vmatpush1.msra.mxu0 %v659
    %694 = vmatprep.subr.mxu0 0.0
    %695 = vmatpush1.msra.mxu0 %v660
    %696 = vmatprep.subr.mxu0 0.0
    %697 = vmatpush1.msra.mxu0 %v661
    %698 = vmatprep.subr.mxu0 0.0
    %699 = vmatpush1.msra.mxu0 %v662
    %700 = vmatprep.subr.mxu0 0.0
    %701 = vmatpush1.msra.mxu0 %v663
    %702 = vmatprep.subr.mxu0 0.0
    %703 = vmatpush1.msra.mxu0 %v664
    %704 = vmatprep.subr.mxu0 0.0
    %705 = vmatpush1.msra.mxu0 %v665
    %706 = vmatprep.subr.mxu0 0.0
    %707 = vmatpush1.msra.mxu0 0.0
    %708 = vmatprep.subr.mxu0 0.0
    %709 = vmatpush1.msra.mxu0 0.0
    %710 = vmatprep.subr.mxu0 0.0
    %711 = vmatpush1.msra.mxu0 0.0
    %712 = vmatprep.subr.mxu0 0.0
    %713 = vmatpush1.msra.mxu0 0.0
    %714 = vmatprep.subr.mxu0 0.0
    %715 = vmatpush1.msra.mxu0 0.0
    %716 = vmatprep.subr.mxu0 0.0
    %717 = vmatpush1.msra.mxu0 0.0
    %718 = vmatprep.subr.mxu0 0.0
    %719 = vmatpush1.msra.mxu0 0.0
    %720 = vmatprep.subr.mxu0 0.0
    %721 = vmatpush1.msra.mxu0 0.0
    %722 = vmatprep.subr.mxu0 0.0
    %723 = vmatpush1.msra.mxu0 0.0
    %724 = vmatprep.subr.mxu0 0.0
    %725 = vmatpush1.msra.mxu0 0.0
    %726 = vmatprep.subr.mxu0 0.0
    %727 = vmatpush1.msra.mxu0 0.0
    %728 = vmatprep.subr.mxu0 0.0
    %729 = vmatpush1.msra.mxu0 0.0
    %730 = vmatprep.subr.mxu0 0.0
    %731 = vmatpush1.msra.mxu0 0.0
    %732 = vmatprep.subr.mxu0 0.0
    %733 = vmatpush1.msra.mxu0 0.0
    %734 = vmatprep.subr.mxu0 0.0
    %735 = vmatpush1.msra.mxu0 0.0
    %736 = vmatprep.subr.mxu0 0.0
    %737 = vmatpush1.msra.mxu0 0.0
    %738 = vmatprep.mubr.f32.mxu0 0.0
    %739 = vmatmul.mubr.f32.gmra.mrb[0].mxu0 %v648
    %v740 = vpop.f32.mrb[0].mxu0
    %v741 = vadd.f32 %v672, %v740
    %v742 = vpop.f32.mrb[0].mxu0
    %743 = vdwg.mxu0
    %v744 = vmax.f32 %v741, 0.0
    %s745 = scalar_lea.vmem [#allocation7], 768
    %v746 = vld [vmem:[%s745] sm:$0xff]
    %v747 = vld [vmem:[%s745 + $0x8] sm:$0xff]
    %v748 = vld [vmem:[%s745 + $0x10] sm:$0xff]
    %v749 = vld [vmem:[%s745 + $0x18] sm:$0xff]
    %v750 = vld [vmem:[%s745 + $0x20] sm:$0xff]
    %v751 = vld [vmem:[%s745 + $0x28] sm:$0xff]
    %v752 = vld [vmem:[%s745 + $0x30] sm:$0xff]
    %v753 = vld [vmem:[%s745 + $0x38] sm:$0xff]
    %v754 = vld [vmem:[%s745 + $0x40] sm:$0xff]
    %v755 = vld [vmem:[%s745 + $0x48] sm:$0xff]
    %v756 = vld [vmem:[%s745 + $0x50] sm:$0xff]
    %v757 = vld [vmem:[%s745 + $0x58] sm:$0xff]
    %v758 = vld [vmem:[%s745 + $0x60] sm:$0xff]
    %v759 = vld [vmem:[%s745 + $0x68] sm:$0xff]
    %v760 = vld [vmem:[%s745 + $0x70] sm:$0xff]
    %v761 = vld [vmem:[%s745 + $0x78] sm:$0xff]
    %s762 = scalar_lea.vmem %s4, 6
    %v763 = vld [vmem:[%s762] sm:$0x1]
    %v765 = vlaneseq
    %v766 = vshrl.u32 %v765, 7
    %v767 = vsub.s32 0, %v766
    %v768 = vrot.slane %v763, %v767
    %770 = vmatprep.subr.mxu0 0.0
    %771 = vmatpush1.msra.mxu0 %v746
    %772 = vmatprep.subr.mxu0 0.0
    %773 = vmatpush1.msra.mxu0 %v747
    %774 = vmatprep.subr.mxu0 0.0
    %775 = vmatpush1.msra.mxu0 %v748
    %776 = vmatprep.subr.mxu0 0.0
    %777 = vmatpush1.msra.mxu0 %v749
    %778 = vmatprep.subr.mxu0 0.0
    %779 = vmatpush1.msra.mxu0 %v750
    %780 = vmatprep.subr.mxu0 0.0
    %781 = vmatpush1.msra.mxu0 %v751
    %782 = vmatprep.subr.mxu0 0.0
    %783 = vmatpush1.msra.mxu0 %v752
    %784 = vmatprep.subr.mxu0 0.0
    %785 = vmatpush1.msra.mxu0 %v753
    %786 = vmatprep.subr.mxu0 0.0
    %787 = vmatpush1.msra.mxu0 %v754
    %788 = vmatprep.subr.mxu0 0.0
    %789 = vmatpush1.msra.mxu0 %v755
    %790 = vmatprep.subr.mxu0 0.0
    %791 = vmatpush1.msra.mxu0 %v756
    %792 = vmatprep.subr.mxu0 0.0
    %793 = vmatpush1.msra.mxu0 %v757
    %794 = vmatprep.subr.mxu0 0.0
    %795 = vmatpush1.msra.mxu0 %v758
    %796 = vmatprep.subr.mxu0 0.0
    %797 = vmatpush1.msra.mxu0 %v759
    %798 = vmatprep.subr.mxu0 0.0
    %799 = vmatpush1.msra.mxu0 %v760
    %800 = vmatprep.subr.mxu0 0.0
    %801 = vmatpush1.msra.mxu0 %v761
    %802 = vmatprep.subr.mxu0 0.0
    %803 = vmatpush1.msra.mxu0 0.0
    %804 = vmatprep.subr.mxu0 0.0
    %805 = vmatpush1.msra.mxu0 0.0
    %806 = vmatprep.subr.mxu0 0.0
    %807 = vmatpush1.msra.mxu0 0.0
    %808 = vmatprep.subr.mxu0 0.0
    %809 = vmatpush1.msra.mxu0 0.0
    %810 = vmatprep.subr.mxu0 0.0
    %811 = vmatpush1.msra.mxu0 0.0
    %812 = vmatprep.subr.mxu0 0.0
    %813 = vmatpush1.msra.mxu0 0.0
    %814 = vmatprep.subr.mxu0 0.0
    %815 = vmatpush1.msra.mxu0 0.0
    %816 = vmatprep.subr.mxu0 0.0
    %817 = vmatpush1.msra.mxu0 0.0
    %818 = vmatprep.subr.mxu0 0.0
    %819 = vmatpush1.msra.mxu0 0.0
    %820 = vmatprep.subr.mxu0 0.0
    %821 = vmatpush1.msra.mxu0 0.0
    %822 = vmatprep.subr.mxu0 0.0
    %823 = vmatpush1.msra.mxu0 0.0
    %824 = vmatprep.subr.mxu0 0.0
    %825 = vmatpush1.msra.mxu0 0.0
    %826 = vmatprep.subr.mxu0 0.0
    %827 = vmatpush1.msra.mxu0 0.0
    %828 = vmatprep.subr.mxu0 0.0
    %829 = vmatpush1.msra.mxu0 0.0
    %830 = vmatprep.subr.mxu0 0.0
    %831 = vmatpush1.msra.mxu0 0.0
    %832 = vmatprep.subr.mxu0 0.0
    %833 = vmatpush1.msra.mxu0 0.0
    %834 = vmatprep.mubr.f32.mxu0 0.0
    %835 = vmatmul.mubr.f32.gmra.mrb[0].mxu0 %v744
    %v836 = vpop.f32.mrb[0].mxu0
    %v837 = vadd.f32 %v768, %v836
    %v838 = vpop.f32.mrb[0].mxu0
    %839 = vdwg.mxu0
    %v840 = vmax.f32 %v837, 0.0
    %s841 = scalar_lea.vmem [#allocation7], 896
    %v842 = vld [vmem:[%s841] sm:$0xff]
    %v843 = vld [vmem:[%s841 + $0x8] sm:$0xff]
    %v844 = vld [vmem:[%s841 + $0x10] sm:$0xff]
    %v845 = vld [vmem:[%s841 + $0x18] sm:$0xff]
    %v846 = vld [vmem:[%s841 + $0x20] sm:$0xff]
    %v847 = vld [vmem:[%s841 + $0x28] sm:$0xff]
    %v848 = vld [vmem:[%s841 + $0x30] sm:$0xff]
    %v849 = vld [vmem:[%s841 + $0x38] sm:$0xff]
    %v850 = vld [vmem:[%s841 + $0x40] sm:$0xff]
    %v851 = vld [vmem:[%s841 + $0x48] sm:$0xff]
    %v852 = vld [vmem:[%s841 + $0x50] sm:$0xff]
    %v853 = vld [vmem:[%s841 + $0x58] sm:$0xff]
    %v854 = vld [vmem:[%s841 + $0x60] sm:$0xff]
    %v855 = vld [vmem:[%s841 + $0x68] sm:$0xff]
    %v856 = vld [vmem:[%s841 + $0x70] sm:$0xff]
    %v857 = vld [vmem:[%s841 + $0x78] sm:$0xff]
    %s858 = scalar_lea.vmem %s4, 7
    %v859 = vld [vmem:[%s858] sm:$0x1]
    %v861 = vlaneseq
    %v862 = vshrl.u32 %v861, 7
    %v863 = vsub.s32 0, %v862
    %v864 = vrot.slane %v859, %v863
    %866 = vmatprep.subr.mxu0 0.0
    %867 = vmatpush1.msra.mxu0 %v842
    %868 = vmatprep.subr.mxu0 0.0
    %869 = vmatpush1.msra.mxu0 %v843
    %870 = vmatprep.subr.mxu0 0.0
    %871 = vmatpush1.msra.mxu0 %v844
    %872 = vmatprep.subr.mxu0 0.0
    %873 = vmatpush1.msra.mxu0 %v845
    %874 = vmatprep.subr.mxu0 0.0
    %875 = vmatpush1.msra.mxu0 %v846
    %876 = vmatprep.subr.mxu0 0.0
    %877 = vmatpush1.msra.mxu0 %v847
    %878 = vmatprep.subr.mxu0 0.0
    %879 = vmatpush1.msra.mxu0 %v848
    %880 = vmatprep.subr.mxu0 0.0
    %881 = vmatpush1.msra.mxu0 %v849
    %882 = vmatprep.subr.mxu0 0.0
    %883 = vmatpush1.msra.mxu0 %v850
    %884 = vmatprep.subr.mxu0 0.0
    %885 = vmatpush1.msra.mxu0 %v851
    %886 = vmatprep.subr.mxu0 0.0
    %887 = vmatpush1.msra.mxu0 %v852
    %888 = vmatprep.subr.mxu0 0.0
    %889 = vmatpush1.msra.mxu0 %v853
    %890 = vmatprep.subr.mxu0 0.0
    %891 = vmatpush1.msra.mxu0 %v854
    %892 = vmatprep.subr.mxu0 0.0
    %893 = vmatpush1.msra.mxu0 %v855
    %894 = vmatprep.subr.mxu0 0.0
    %895 = vmatpush1.msra.mxu0 %v856
    %896 = vmatprep.subr.mxu0 0.0
    %897 = vmatpush1.msra.mxu0 %v857
    %898 = vmatprep.subr.mxu0 0.0
    %899 = vmatpush1.msra.mxu0 0.0
    %900 = vmatprep.subr.mxu0 0.0
    %901 = vmatpush1.msra.mxu0 0.0
    %902 = vmatprep.subr.mxu0 0.0
    %903 = vmatpush1.msra.mxu0 0.0
    %904 = vmatprep.subr.mxu0 0.0
    %905 = vmatpush1.msra.mxu0 0.0
    %906 = vmatprep.subr.mxu0 0.0
    %907 = vmatpush1.msra.mxu0 0.0
    %908 = vmatprep.subr.mxu0 0.0
    %909 = vmatpush1.msra.mxu0 0.0
    %910 = vmatprep.subr.mxu0 0.0
    %911 = vmatpush1.msra.mxu0 0.0
    %912 = vmatprep.subr.mxu0 0.0
    %913 = vmatpush1.msra.mxu0 0.0
    %914 = vmatprep.subr.mxu0 0.0
    %915 = vmatpush1.msra.mxu0 0.0
    %916 = vmatprep.subr.mxu0 0.0
    %917 = vmatpush1.msra.mxu0 0.0
    %918 = vmatprep.subr.mxu0 0.0
    %919 = vmatpush1.msra.mxu0 0.0
    %920 = vmatprep.subr.mxu0 0.0
    %921 = vmatpush1.msra.mxu0 0.0
    %922 = vmatprep.subr.mxu0 0.0
    %923 = vmatpush1.msra.mxu0 0.0
    %924 = vmatprep.subr.mxu0 0.0
    %925 = vmatpush1.msra.mxu0 0.0
    %926 = vmatprep.subr.mxu0 0.0
    %927 = vmatpush1.msra.mxu0 0.0
    %928 = vmatprep.subr.mxu0 0.0
    %929 = vmatpush1.msra.mxu0 0.0
    %930 = vmatprep.mubr.f32.mxu0 0.0
    %931 = vmatmul.mubr.f32.gmra.mrb[0].mxu0 %v840
    %v932 = vpop.f32.mrb[0].mxu0
    %v933 = vadd.f32 %v864, %v932
    %v934 = vpop.f32.mrb[0].mxu0
    %935 = vdwg.mxu0
    %v936 = vmax.f32 %v933, 0.0
    %s937 = scalar_lea.vmem [#allocation7], 1024
    %v938 = vld [vmem:[%s937] sm:$0xff]
    %v939 = vld [vmem:[%s937 + $0x8] sm:$0xff]
    %v940 = vld [vmem:[%s937 + $0x10] sm:$0xff]
    %v941 = vld [vmem:[%s937 + $0x18] sm:$0xff]
    %v942 = vld [vmem:[%s937 + $0x20] sm:$0xff]
    %v943 = vld [vmem:[%s937 + $0x28] sm:$0xff]
    %v944 = vld [vmem:[%s937 + $0x30] sm:$0xff]
    %v945 = vld [vmem:[%s937 + $0x38] sm:$0xff]
    %v946 = vld [vmem:[%s937 + $0x40] sm:$0xff]
    %v947 = vld [vmem:[%s937 + $0x48] sm:$0xff]
    %v948 = vld [vmem:[%s937 + $0x50] sm:$0xff]
    %v949 = vld [vmem:[%s937 + $0x58] sm:$0xff]
    %v950 = vld [vmem:[%s937 + $0x60] sm:$0xff]
    %v951 = vld [vmem:[%s937 + $0x68] sm:$0xff]
    %v952 = vld [vmem:[%s937 + $0x70] sm:$0xff]
    %v953 = vld [vmem:[%s937 + $0x78] sm:$0xff]
    %s954 = scalar_lea.vmem %s4, 8
    %v955 = vld [vmem:[%s954] sm:$0x1]
    %v957 = vlaneseq
    %v958 = vshrl.u32 %v957, 7
    %v959 = vsub.s32 0, %v958
    %v960 = vrot.slane %v955, %v959
    %962 = vmatprep.subr.mxu0 0.0
    %963 = vmatpush1.msra.mxu0 %v938
    %964 = vmatprep.subr.mxu0 0.0
    %965 = vmatpush1.msra.mxu0 %v939
    %966 = vmatprep.subr.mxu0 0.0
    %967 = vmatpush1.msra.mxu0 %v940
    %968 = vmatprep.subr.mxu0 0.0
    %969 = vmatpush1.msra.mxu0 %v941
    %970 = vmatprep.subr.mxu0 0.0
    %971 = vmatpush1.msra.mxu0 %v942
    %972 = vmatprep.subr.mxu0 0.0
    %973 = vmatpush1.msra.mxu0 %v943
    %974 = vmatprep.subr.mxu0 0.0
    %975 = vmatpush1.msra.mxu0 %v944
    %976 = vmatprep.subr.mxu0 0.0
    %977 = vmatpush1.msra.mxu0 %v945
    %978 = vmatprep.subr.mxu0 0.0
    %979 = vmatpush1.msra.mxu0 %v946
    %980 = vmatprep.subr.mxu0 0.0
    %981 = vmatpush1.msra.mxu0 %v947
    %982 = vmatprep.subr.mxu0 0.0
    %983 = vmatpush1.msra.mxu0 %v948
    %984 = vmatprep.subr.mxu0 0.0
    %985 = vmatpush1.msra.mxu0 %v949
    %986 = vmatprep.subr.mxu0 0.0
    %987 = vmatpush1.msra.mxu0 %v950
    %988 = vmatprep.subr.mxu0 0.0
    %989 = vmatpush1.msra.mxu0 %v951
    %990 = vmatprep.subr.mxu0 0.0
    %991 = vmatpush1.msra.mxu0 %v952
    %992 = vmatprep.subr.mxu0 0.0
    %993 = vmatpush1.msra.mxu0 %v953
    %994 = vmatprep.subr.mxu0 0.0
    %995 = vmatpush1.msra.mxu0 0.0
    %996 = vmatprep.subr.mxu0 0.0
    %997 = vmatpush1.msra.mxu0 0.0
    %998 = vmatprep.subr.mxu0 0.0
    %999 = vmatpush1.msra.mxu0 0.0
    %1000 = vmatprep.subr.mxu0 0.0
    %1001 = vmatpush1.msra.mxu0 0.0
    %1002 = vmatprep.subr.mxu0 0.0
    %1003 = vmatpush1.msra.mxu0 0.0
    %1004 = vmatprep.subr.mxu0 0.0
    %1005 = vmatpush1.msra.mxu0 0.0
    %1006 = vmatprep.subr.mxu0 0.0
    %1007 = vmatpush1.msra.mxu0 0.0
    %1008 = vmatprep.subr.mxu0 0.0
    %1009 = vmatpush1.msra.mxu0 0.0
    %1010 = vmatprep.subr.mxu0 0.0
    %1011 = vmatpush1.msra.mxu0 0.0
    %1012 = vmatprep.subr.mxu0 0.0
    %1013 = vmatpush1.msra.mxu0 0.0
    %1014 = vmatprep.subr.mxu0 0.0
    %1015 = vmatpush1.msra.mxu0 0.0
    %1016 = vmatprep.subr.mxu0 0.0
    %1017 = vmatpush1.msra.mxu0 0.0
    %1018 = vmatprep.subr.mxu0 0.0
    %1019 = vmatpush1.msra.mxu0 0.0
    %1020 = vmatprep.subr.mxu0 0.0
    %1021 = vmatpush1.msra.mxu0 0.0
    %1022 = vmatprep.subr.mxu0 0.0
    %1023 = vmatpush1.msra.mxu0 0.0
    %1024 = vmatprep.subr.mxu0 0.0
    %1025 = vmatpush1.msra.mxu0 0.0
    %1026 = vmatprep.mubr.f32.mxu0 0.0
    %1027 = vmatmul.mubr.f32.gmra.mrb[0].mxu0 %v936
    %v1028 = vpop.f32.mrb[0].mxu0
    %v1029 = vadd.f32 %v960, %v1028
    %v1030 = vpop.f32.mrb[0].mxu0
    %1031 = vdwg.mxu0
    %v1032 = vmax.f32 %v1029, 0.0
    %v1033 = vld [vmem:[#allocation8] sm:$0xff]
    %v1034 = vld [vmem:[#allocation8 + $0x8] sm:$0xff]
    %v1035 = vld [vmem:[#allocation8 + $0x10] sm:$0xff]
    %v1036 = vld [vmem:[#allocation8 + $0x18] sm:$0xff]
    %v1037 = vld [vmem:[#allocation8 + $0x20] sm:$0xff]
    %v1038 = vld [vmem:[#allocation8 + $0x28] sm:$0xff]
    %v1039 = vld [vmem:[#allocation8 + $0x30] sm:$0xff]
    %v1040 = vld [vmem:[#allocation8 + $0x38] sm:$0xff]
    %v1041 = vld [vmem:[#allocation8 + $0x40] sm:$0xff]
    %v1042 = vld [vmem:[#allocation8 + $0x48] sm:$0xff]
    %v1043 = vld [vmem:[#allocation8 + $0x50] sm:$0xff]
    %v1044 = vld [vmem:[#allocation8 + $0x58] sm:$0xff]
    %v1045 = vld [vmem:[#allocation8 + $0x60] sm:$0xff]
    %v1046 = vld [vmem:[#allocation8 + $0x68] sm:$0xff]
    %v1047 = vld [vmem:[#allocation8 + $0x70] sm:$0xff]
    %v1048 = vld [vmem:[#allocation8 + $0x78] sm:$0xff]
    %v1049 = vld [vmem:[%s6] sm:$0x1]
    %v1051 = vlaneseq
    %v1052 = vshrl.u32 %v1051, 7
    %v1053 = vsub.s32 0, %v1052
    %v1054 = vrot.slane %v1049, %v1053
    %1056 = vmatprep.subr.mxu0 0.0
    %1057 = vmatpush1.msra.mxu0 %v1033
    %1058 = vmatprep.subr.mxu0 0.0
    %1059 = vmatpush1.msra.mxu0 %v1034
    %1060 = vmatprep.subr.mxu0 0.0
    %1061 = vmatpush1.msra.mxu0 %v1035
    %1062 = vmatprep.subr.mxu0 0.0
    %1063 = vmatpush1.msra.mxu0 %v1036
    %1064 = vmatprep.subr.mxu0 0.0
    %1065 = vmatpush1.msra.mxu0 %v1037
    %1066 = vmatprep.subr.mxu0 0.0
    %1067 = vmatpush1.msra.mxu0 %v1038
    %1068 = vmatprep.subr.mxu0 0.0
    %1069 = vmatpush1.msra.mxu0 %v1039
    %1070 = vmatprep.subr.mxu0 0.0
    %1071 = vmatpush1.msra.mxu0 %v1040
    %1072 = vmatprep.subr.mxu0 0.0
    %1073 = vmatpush1.msra.mxu0 %v1041
    %1074 = vmatprep.subr.mxu0 0.0
    %1075 = vmatpush1.msra.mxu0 %v1042
    %1076 = vmatprep.subr.mxu0 0.0
    %1077 = vmatpush1.msra.mxu0 %v1043
    %1078 = vmatprep.subr.mxu0 0.0
    %1079 = vmatpush1.msra.mxu0 %v1044
    %1080 = vmatprep.subr.mxu0 0.0
    %1081 = vmatpush1.msra.mxu0 %v1045
    %1082 = vmatprep.subr.mxu0 0.0
    %1083 = vmatpush1.msra.mxu0 %v1046
    %1084 = vmatprep.subr.mxu0 0.0
    %1085 = vmatpush1.msra.mxu0 %v1047
    %1086 = vmatprep.subr.mxu0 0.0
    %1087 = vmatpush1.msra.mxu0 %v1048
    %1088 = vmatprep.subr.mxu0 0.0
    %1089 = vmatpush1.msra.mxu0 0.0
    %1090 = vmatprep.subr.mxu0 0.0
    %1091 = vmatpush1.msra.mxu0 0.0
    %1092 = vmatprep.subr.mxu0 0.0
    %1093 = vmatpush1.msra.mxu0 0.0
    %1094 = vmatprep.subr.mxu0 0.0
    %1095 = vmatpush1.msra.mxu0 0.0
    %1096 = vmatprep.subr.mxu0 0.0
    %1097 = vmatpush1.msra.mxu0 0.0
    %1098 = vmatprep.subr.mxu0 0.0
    %1099 = vmatpush1.msra.mxu0 0.0
    %1100 = vmatprep.subr.mxu0 0.0
    %1101 = vmatpush1.msra.mxu0 0.0
    %1102 = vmatprep.subr.mxu0 0.0
    %1103 = vmatpush1.msra.mxu0 0.0
    %1104 = vmatprep.subr.mxu0 0.0
    %1105 = vmatpush1.msra.mxu0 0.0
    %1106 = vmatprep.subr.mxu0 0.0
    %1107 = vmatpush1.msra.mxu0 0.0
    %1108 = vmatprep.subr.mxu0 0.0
    %1109 = vmatpush1.msra.mxu0 0.0
    %1110 = vmatprep.subr.mxu0 0.0
    %1111 = vmatpush1.msra.mxu0 0.0
    %1112 = vmatprep.subr.mxu0 0.0
    %1113 = vmatpush1.msra.mxu0 0.0
    %1114 = vmatprep.subr.mxu0 0.0
    %1115 = vmatpush1.msra.mxu0 0.0
    %1116 = vmatprep.subr.mxu0 0.0
    %1117 = vmatpush1.msra.mxu0 0.0
    %1118 = vmatprep.subr.mxu0 0.0
    %1119 = vmatpush1.msra.mxu0 0.0
    %1120 = vmatprep.mubr.f32.mxu0 0.0
    %1121 = vmatmul.mubr.f32.gmra.mrb[0].mxu0 %v1032
    %v1122 = vpop.f32.mrb[0].mxu0
    %v1123 = vadd.f32 %v1054, %v1122
    %v1124 = vpop.f32.mrb[0].mxu0
    %1125 = vdwg.mxu0
    %v1126 = vsub.f32 0.0, %v1123
    %v1127 = vmul.f32 %v1126, 1.442695
    %v1128 = vpow.pop %v1127
    %v1129 = vadd.f32 %v1128, 1.0
    %v1130 = vrcp.pop %v1129
    %1131 = vst [vmem:[#allocation10] sm:$0xff] %v1130
    // Predicated region
    $region46: #{tpu_custom_call.1} parent=1 // pred_check
      _
    $region47: #{tpu_custom_call.1} parent=1 // pred_check_branch
      %1133 = sbr.rel (0) target = $region49
    $region48: #{tpu_custom_call.1} parent=1 // pred_region
      %s1135 = ssub.s32 128, 128
      %1136 = vsyncadd [#allocation4], %s1135
      %s1138 = sshll.u32 [#allocation10], 4
      %s1139 = int_to_ptr.vmem [resolvable:$true] %s1138
      %1141 = dma.vmem_to_hbm [thread:$0]  %s1139, 128, %s7, [#allocation4]
    $region49: #{tpu_custom_call.1} parent=1 // pred_fallthru
      _
    // Predicated region
    $region50: #{tpu_custom_call.1} parent=1 // pred_check
      _
    $region51: #{tpu_custom_call.1} parent=1 // pred_check_branch
      %1143 = sbr.rel (0) target = $region53
    $region52: #{tpu_custom_call.1} parent=1 // pred_region
      %1144 = dma.done [#allocation4], 128
    $region53: #{tpu_custom_call.1} parent=1 // pred_fallthru
      _
    %1145 = vsyncpa [#allocation3], 1
    %1146 = vsyncpa [#allocation6], 1
    %1147 = vsyncpa [#allocation9], 1
    %1148 = vsyncpa [#allocation4], 1

</llo_original>
